<compile_context>
chip_gen: v5e
topology: v5e:2x2
jax: 0.10.0
libtpu: 0.0.40
codegen_flags: <defaults>
</compile_context>

<pallas_src>
import functools

import jax
import jax.numpy as jnp
from jax.experimental import pallas as pl
from jax.experimental.pallas import tpu as pltpu


def _sigmoid(x):
    # Single-EUP sigmoid: sigmoid(x) = 0.5 * (1 + tanh(x/2)).
    return 0.5 * (jnp.tanh(0.5 * x) + 1.0)


# ----------------------------- Pallas kernel --------------------------------

def _gru_layers_kernel(T, B, H, P, chunks,
                       x0_hbm, len_ref, w_ref, bih_ref, bhh_ref,
                       out_ref, hid_ref,
                       xbuf, gi_buf, dma_sem):
    """One grid step == one GRU layer over all T timesteps."""
    l = pl.program_id(0)
    num_layers = pl.num_programs(0)
    wdt = w_ref.dtype
    G = 3 * H

    @pl.when(l == 0)
    def _init():
        # x0 is only consumed by layer 0: DMA it once from HBM into the VMEM
        # carry buffer instead of keeping it as a resident BlockSpec window.
        cp = pltpu.make_async_copy(x0_hbm, xbuf, dma_sem)
        cp.start()
        cp.wait()

    len_col = len_ref[...]                                 # (B, 1) int32
    b_ih = bih_ref[0]                                      # (1, 3H) f32
    b_hh = bhh_ref[0]                                      # (1, 3H) f32

    h = jnp.zeros((B, H), jnp.float32)

    # Static chunking over T: caps gi_buf VMEM and the big-matmul vreg
    # pressure independent of sequence length.
    for (t0, tc) in chunks:
        # ---- per-chunk input projection: one (tc*B, P) x (P, 3H) matmul ----
        w_ih = w_ref[0, 0:P, :]                            # (P, 3H)
        x2d = xbuf[pl.ds(t0, tc)].reshape(tc * B, P)
        gi = jnp.dot(x2d.astype(wdt), w_ih,
                     preferred_element_type=jnp.float32) + b_ih
        if tc == gi_buf.shape[0]:
            gi_buf[...] = gi.reshape(tc, B, G)
        else:
            gi_buf[pl.ds(0, tc)] = gi.reshape(tc, B, G)

        # ---- serial recurrence: only the small (B,H)x(H,3H) matmul/step ----
        # W_hh loaded once per chunk (hoisted out of the unrolled step body).
        w_hh = w_ref[0, P:P + H, :]                        # (H, 3H)

        def step(tl, h, _t0=t0):
            t = _t0 + tl
            gi_t = gi_buf[tl]                              # (B, 3H)
            gh = jnp.dot(h.astype(wdt), w_hh,
                         preferred_element_type=jnp.float32) + b_hh
            r = _sigmoid(gi_t[:, 0:H] + gh[:, 0:H])
            z = _sigmoid(gi_t[:, H:2 * H] + gh[:, H:2 * H])
            n = jnp.tanh(gi_t[:, 2 * H:3 * H] + r * gh[:, 2 * H:3 * H])
            # Packed-sequence semantics fused with the gate update:
            #   h_new = h + (1-z)*(n-h);  h_upd = h + m*(h_new-h)
            #         = h + (m*(1-z))*(n-h)
            m = (t < len_col).astype(jnp.float32)          # (B, 1)
            h_upd = h + (m * (1.0 - z)) * (n - h)
            if P == H:
                xbuf[t] = h_upd
            else:
                xbuf[t, :, 0:H] = h_upd
            return h_upd

        h = jax.lax.fori_loop(0, tc, step, h, unroll=min(tc, 8))

    hid_ref[0] = h                                         # final hidden, this layer

    @pl.when(l == num_layers - 1)
    def _finalize():
        top = xbuf[...] if P == H else xbuf[:, :, 0:H]
        # pad_packed_sequence: padded positions of the top-layer output are 0.
        t_iota = jax.lax.broadcasted_iota(jnp.int32, (T, B, H), 0)
        len_b = jnp.broadcast_to(len_col.reshape(1, B, 1), (T, B, H))
        out_ref[...] = jnp.where(t_iota < len_b, top, 0.0)


def _round_up(n, m):
    return ((n + m - 1) // m) * m


def gru_encoder_pallas(emb_tbe, lengths, params,
                       compute_dtype=jnp.float32, t_chunk=64):
    """emb_tbe: (T, B, E) f32; lengths: (B,) int; params: list of
    (w_ih (in,3H), w_hh (H,3H), b_ih (3H,), b_hh (3H,)) in PyTorch gate order [r,z,n]."""
    T, B0, E = emb_tbe.shape
    L = len(params)
    H = params[0][1].shape[0]
    G = 3 * H

    # Best perf when H % 128 == 0 (lane-aligned gate slices).  Pad batch to a
    # sublane multiple so the (T,B,P)->(T*B,P) reshape is layout-free; padded
    # rows get length 0 (h stays 0) and are sliced away afterwards.
    B = _round_up(B0, 8)
    if B != B0:
        emb_tbe = jnp.pad(emb_tbe, ((0, 0), (0, B - B0), (0, 0)))
        lengths = jnp.pad(lengths, (0, B - B0))

    # Common lane-padded input width for every layer's w_ih; padded rows/cols
    # of the weight slab stay zero so gi is unchanged.
    P = _round_up(max(E, H), 128)
    if P == E:
        x0 = emb_tbe.astype(jnp.float32)
    else:
        x0 = jnp.zeros((T, B, P), jnp.float32).at[:, :, :E].set(emb_tbe)

    # Pack per-layer weights into one slab: rows [0:P] = w_ih, rows [P:P+H] = w_hh.
    w_all = jnp.zeros((L, P + H, G), compute_dtype)
    bih_all = jnp.zeros((L, 1, G), jnp.float32)
    bhh_all = jnp.zeros((L, 1, G), jnp.float32)
    for l, (w_ih, w_hh, b_ih, b_hh) in enumerate(params):
        in_dim = w_ih.shape[0]
        w_all = w_all.at[l, :in_dim, :].set(w_ih.astype(compute_dtype))
        w_all = w_all.at[l, P:P + H, :].set(w_hh.astype(compute_dtype))
        bih_all = bih_all.at[l, 0, :].set(b_ih.astype(jnp.float32))
        bhh_all = bhh_all.at[l, 0, :].set(b_hh.astype(jnp.float32))

    lengths_2d = lengths.reshape(B, 1).astype(jnp.int32)

    # Static T-chunk schedule (bounds gi_buf VMEM independent of T).
    tc_max = min(T, t_chunk)
    chunks = []
    t0 = 0
    while t0 < T:
        tc = min(tc_max, T - t0)
        chunks.append((t0, tc))
        t0 += tc
    chunks = tuple(chunks)

    grid_spec = pltpu.PrefetchScalarGridSpec(
        num_scalar_prefetch=0,
        grid=(L,),
        in_specs=[
            pl.BlockSpec(memory_space=pl.ANY),                  # embeddings (HBM, DMA'd once)
            pl.BlockSpec((B, 1), lambda l: (0, 0)),             # lengths (resident)
            pl.BlockSpec((1, P + H, G), lambda l: (l, 0, 0)),   # per-layer weight slab
            pl.BlockSpec((1, 1, G), lambda l: (l, 0, 0)),       # b_ih
            pl.BlockSpec((1, 1, G), lambda l: (l, 0, 0)),       # b_hh
        ],
        out_specs=[
            pl.BlockSpec((T, B, H), lambda l: (0, 0, 0)),       # top-layer outputs (resident)
            pl.BlockSpec((1, B, H), lambda l: (l, 0, 0)),       # final hidden, per layer
        ],
        scratch_shapes=[
            pltpu.VMEM((T, B, P), jnp.float32),        # layer input/output carry
            pltpu.VMEM((tc_max, B, G), jnp.float32),   # gi for one T-chunk
            pltpu.SemaphoreType.DMA(()),               # x0 HBM->VMEM fill
        ],
    )

    outputs_tbh, hiddens = pl.pallas_call(
        functools.partial(_gru_layers_kernel, T, B, H, P, chunks),
        grid_spec=grid_spec,
        out_shape=(
            jax.ShapeDtypeStruct((T, B, H), jnp.float32),
            jax.ShapeDtypeStruct((L, B, H), jnp.float32),
        ),
        compiler_params=pltpu.CompilerParams(
            dimension_semantics=("arbitrary",),   # layers are sequentially dependent
            vmem_limit_bytes=32 * 1024 * 1024,
        ),
    )(x0, lengths_2d, w_all, bih_all, bhh_all)

    if B != B0:
        outputs_tbh = outputs_tbh[:, :B0]
        hiddens = hiddens[:, :B0]
    return outputs_tbh, hiddens


# ------------------------------ Encoder wrapper ------------------------------

def encoder_forward(inputs, lengths, embedding_table, params,
                    compute_dtype=jnp.float32):
    """Mirrors Encoder.forward: inputs (B, T) int32 token ids, lengths (B,) int32.
    On v5e/v6e/v7x pass compute_dtype=jnp.bfloat16 for bf16 MXU operands (f32 accum)."""
    emb = jnp.take(embedding_table, inputs, axis=0)              # (B, T, E)  glue gather
    emb_tbe = jnp.transpose(emb, (1, 0, 2)).astype(jnp.float32)  # (T, B, E)  time-major
    outputs_tbh, hiddens = gru_encoder_pallas(emb_tbe, lengths, params, compute_dtype)
    outputs = jnp.transpose(outputs_tbh, (1, 0, 2))              # (B, T, H)  batch_first
    return outputs, hiddens


# ------------------------------ pure-JAX reference ---------------------------

def encoder_reference(inputs, lengths, embedding_table, params):
    emb = jnp.take(embedding_table, inputs, axis=0)              # (B, T, E)
    x = jnp.transpose(emb, (1, 0, 2)).astype(jnp.float32)        # (T, B, E)
    T, B, E = x.shape
    L = len(params)
    H = params[0][1].shape[0]
    h = jnp.zeros((L, B, H), jnp.float32)
    outs = []
    for t in range(T):
        mask = (lengths > t)[:, None]
        inp = x[t]
        new_h = []
        for l in range(L):
            w_ih, w_hh, b_ih, b_hh = params[l]
            h_prev = h[l]
            gi = inp @ w_ih + b_ih
            gh = h_prev @ w_hh + b_hh
            r = jax.nn.sigmoid(gi[:, :H] + gh[:, :H])
            z = jax.nn.sigmoid(gi[:, H:2 * H] + gh[:, H:2 * H])
            n = jnp.tanh(gi[:, 2 * H:] + r * gh[:, 2 * H:])
            hn = (1.0 - z) * n + z * h_prev
            hu = jnp.where(mask, hn, h_prev)
            new_h.append(hu)
            inp = hu
        h = jnp.stack(new_h)
        outs.append(jnp.where(mask, h[-1], 0.0))
    outputs = jnp.transpose(jnp.stack(outs), (1, 0, 2))          # (B, T, H)
    return outputs, h


# ----------------------------------- main ------------------------------------

if __name__ == "__main__":
    VOCAB = 50
    EMB = 128          # embedding_size (lane-aligned)
    HIDDEN = 128       # hidden_size
    LAYERS = 2         # num_layers
    B, T = 8, 8        # batch, max sequence length

    key = jax.random.PRNGKey(0)
    k_emb, k_ids, *k_w = jax.random.split(key, 2 + 4 * LAYERS)

    # Frozen embedding table (the "embedding_tensor" handed to __init__).
    embedding_table = jax.random.normal(k_emb, (VOCAB, EMB), jnp.float32)

    # GRU parameters, PyTorch gate order [r, z, n]; stored transposed (in, 3H).
    bound = 1.0 / jnp.sqrt(jnp.float32(HIDDEN))
    params = []
    for l in range(LAYERS):
        in_dim = EMB if l == 0 else HIDDEN
        kk = jax.random.split(k_w[l], 4)
        w_ih = jax.random.uniform(kk[0], (in_dim, 3 * HIDDEN), jnp.float32, -bound, bound)
        w_hh = jax.random.uniform(kk[1], (HIDDEN, 3 * HIDDEN), jnp.float32, -bound, bound)
        b_ih = jax.random.uniform(kk[2], (3 * HIDDEN,), jnp.float32, -bound, bound)
        b_hh = jax.random.uniform(kk[3], (3 * HIDDEN,), jnp.float32, -bound, bound)
        params.append((w_ih, w_hh, b_ih, b_hh))

    inputs = jax.random.randint(k_ids, (B, T), 0, VOCAB, dtype=jnp.int32)
    lengths = jnp.array([8, 5, 3, 1, 8, 6, 2, 4], dtype=jnp.int32)

    outputs, hiddens = encoder_forward(inputs, lengths, embedding_table, params)
    outputs = jax.block_until_ready(outputs)
    hiddens = jax.block_until_ready(hiddens)

    ref_out, ref_hid = encoder_reference(inputs, lengths, embedding_table, params)

    assert outputs.shape == (B, T, HIDDEN)
    assert hiddens.shape == (LAYERS, B, HIDDEN)
    assert jnp.allclose(outputs, ref_out, rtol=1e-5, atol=1e-5)
    assert jnp.allclose(hiddens, ref_hid, rtol=1e-5, atol=1e-5)

    print("KERNEL_OK")
</pallas_src>

<mosaic_0001>
module attributes {stable_mosaic.version = 11 : i64} {
  func.func @_gru_layers_kernel(%arg0: i32, %arg1: memref<8x8x128xf32, #tpu.memory_space<any>>, %arg2: memref<8x1xi32, #tpu.memory_space<vmem>>, %arg3: memref<1x256x384xf32, #tpu.memory_space<vmem>>, %arg4: memref<1x1x384xf32, #tpu.memory_space<vmem>>, %arg5: memref<1x1x384xf32, #tpu.memory_space<vmem>>, %arg6: memref<8x8x128xf32, #tpu.memory_space<vmem>>, %arg7: memref<1x8x128xf32, #tpu.memory_space<vmem>>, %arg8: memref<8x8x128xf32, #tpu.memory_space<vmem>>, %arg9: memref<8x8x384xf32, #tpu.memory_space<vmem>>, %arg10: memref<!tpu.dma_semaphore, #tpu.memory_space<semaphore_mem>>) attributes {dimension_semantics = [#tpu.dimension_semantics<arbitrary>], iteration_bounds = array<i64: 2>, scalar_prefetch = 0 : i64, scratch_operands = 3 : i64, tpu.core_type = #tpu.core_type<tc>, window_params = [{}, {pipeline_mode = #tpu.pipeline_mode<synchronous>, transform_indices = @transform_1, window_bounds = array<i64: 8, 1>}, {transform_indices = @transform_2, window_bounds = array<i64: 1, 256, 384>}, {transform_indices = @transform_3, window_bounds = array<i64: 1, 1, 384>}, {transform_indices = @transform_4, window_bounds = array<i64: 1, 1, 384>}, {pipeline_mode = #tpu.pipeline_mode<synchronous>, transform_indices = @transform_5, window_bounds = array<i64: 8, 8, 128>}, {transform_indices = @transform_6, window_bounds = array<i64: 1, 8, 128>}]} {
    %c0_i32 = arith.constant 0 : i32
    %0 = arith.cmpi eq, %arg0, %c0_i32 : i32
    %1 = arith.extui %0 : i1 to i32
    %c0_i32_0 = arith.constant 0 : i32
    %2 = arith.cmpi ne, %1, %c0_i32_0 : i32
    scf.if %2 {
      tpu.enqueue_dma source(%arg1 : memref<8x8x128xf32, #tpu.memory_space<any>>) target(%arg8 : memref<8x8x128xf32, #tpu.memory_space<vmem>>) target_semaphore(%arg10 : memref<!tpu.dma_semaphore, #tpu.memory_space<semaphore_mem>>)
      tpu.wait_dma2 semaphore(%arg10 : memref<!tpu.dma_semaphore, #tpu.memory_space<semaphore_mem>>) src(%arg1 : memref<8x8x128xf32, #tpu.memory_space<any>>) dst(%arg8 : memref<8x8x128xf32, #tpu.memory_space<vmem>>)
    } else {
    }
    %c0 = arith.constant 0 : index
    %c0_1 = arith.constant 0 : index
    %3 = vector.load %arg2[%c0, %c0_1] : memref<8x1xi32, #tpu.memory_space<vmem>>, vector<8x1xi32>
    %c0_2 = arith.constant 0 : index
    %c0_3 = arith.constant 0 : index
    %c0_4 = arith.constant 0 : index
    %4 = vector.load %arg4[%c0_2, %c0_3, %c0_4] : memref<1x1x384xf32, #tpu.memory_space<vmem>>, vector<1x1x384xf32>
    %5 = vector.shape_cast %4 : vector<1x1x384xf32> to vector<1x384xf32>
    %c0_5 = arith.constant 0 : index
    %c0_6 = arith.constant 0 : index
    %c0_7 = arith.constant 0 : index
    %6 = vector.load %arg5[%c0_5, %c0_6, %c0_7] : memref<1x1x384xf32, #tpu.memory_space<vmem>>, vector<1x1x384xf32>
    %7 = vector.shape_cast %6 : vector<1x1x384xf32> to vector<1x384xf32>
    %cst = arith.constant 0.000000e+00 : f32
    %8 = vector.broadcast %cst : f32 to vector<8x128xf32>
    %c0_8 = arith.constant 0 : index
    %c0_9 = arith.constant 0 : index
    %c0_10 = arith.constant 0 : index
    %9 = vector.load %arg3[%c0_8, %c0_9, %c0_10] : memref<1x256x384xf32, #tpu.memory_space<vmem>>, vector<1x128x384xf32>
    %10 = vector.shape_cast %9 : vector<1x128x384xf32> to vector<128x384xf32>
    %c0_11 = arith.constant 0 : index
    %c0_12 = arith.constant 0 : index
    %c0_13 = arith.constant 0 : index
    %11 = vector.load %arg8[%c0_11, %c0_12, %c0_13] : memref<8x8x128xf32, #tpu.memory_space<vmem>>, vector<8x8x128xf32>
    %12 = vector.shape_cast %11 : vector<8x8x128xf32> to vector<64x128xf32>
    %cst_14 = arith.constant dense<0.000000e+00> : vector<64x384xf32>
    %13 = tpu.matmul %12, %10, %cst_14 {dimension_numbers = #tpu.dot_dimension_numbers<[1], [0], [0], [1], [0, 0, 1, 1], [], []>} : vector<64x128xf32>, vector<128x384xf32>, vector<64x384xf32> -> vector<64x384xf32>
    %14 = vector.broadcast %5 : vector<1x384xf32> to vector<64x384xf32>
    %15 = arith.addf %13, %14 : vector<64x384xf32>
    %16 = vector.shape_cast %15 : vector<64x384xf32> to vector<8x8x384xf32>
    %c0_15 = arith.constant 0 : index
    %c0_16 = arith.constant 0 : index
    %c0_17 = arith.constant 0 : index
    %17 = vector.load %arg9[%c0_15, %c0_16, %c0_17] : memref<8x8x384xf32, #tpu.memory_space<vmem>>, vector<8x8x384xf32>
    tpu.vector_store %arg9[%c0_15, %c0_16, %c0_17], %16 {strides = array<i32>} : memref<8x8x384xf32, #tpu.memory_space<vmem>>, vector<8x8x384xf32>,
    %c0_18 = arith.constant 0 : index
    %c128 = arith.constant 128 : index
    %c0_19 = arith.constant 0 : index
    %18 = vector.load %arg3[%c0_18, %c128, %c0_19] : memref<1x256x384xf32, #tpu.memory_space<vmem>>, vector<1x128x384xf32>
    %19 = vector.shape_cast %18 : vector<1x128x384xf32> to vector<128x384xf32>
    %c0_i32_20 = arith.constant 0 : i32
    %c0_i32_21 = arith.constant 0 : i32
    %20 = arith.addi %c0_i32_21, %c0_i32_20 : i32
    %21 = arith.index_cast %c0_i32_20 : i32 to index
    %c0_22 = arith.constant 0 : index
    %c0_23 = arith.constant 0 : index
    %22 = vector.load %arg9[%21, %c0_22, %c0_23] : memref<8x8x384xf32, #tpu.memory_space<vmem>>, vector<1x8x384xf32>
    %23 = vector.shape_cast %22 : vector<1x8x384xf32> to vector<8x384xf32>
    %cst_24 = arith.constant dense<0.000000e+00> : vector<8x384xf32>
    %24 = tpu.matmul %8, %19, %cst_24 {dimension_numbers = #tpu.dot_dimension_numbers<[1], [0], [0], [1], [0, 0, 1, 1], [], []>} : vector<8x128xf32>, vector<128x384xf32>, vector<8x384xf32> -> vector<8x384xf32>
    %25 = vector.broadcast %7 : vector<1x384xf32> to vector<8x384xf32>
    %26 = arith.addf %24, %25 : vector<8x384xf32>
    %27 = vector.extract_strided_slice %23 {offsets = [0, 0], sizes = [8, 128], strides = [1, 1]} : vector<8x384xf32> to vector<8x128xf32>
    %28 = vector.extract_strided_slice %26 {offsets = [0, 0], sizes = [8, 128], strides = [1, 1]} : vector<8x384xf32> to vector<8x128xf32>
    %29 = arith.addf %27, %28 : vector<8x128xf32>
    %cst_25 = arith.constant 5.000000e-01 : f32
    %30 = vector.broadcast %cst_25 : f32 to vector<8x128xf32>
    %31 = arith.mulf %30, %29 : vector<8x128xf32>
    %32 = math.tanh %31 : vector<8x128xf32>
    %cst_26 = arith.constant 1.000000e+00 : f32
    %33 = vector.broadcast %cst_26 : f32 to vector<8x128xf32>
    %34 = arith.addf %32, %33 : vector<8x128xf32>
    %cst_27 = arith.constant 5.000000e-01 : f32
    %35 = vector.broadcast %cst_27 : f32 to vector<8x128xf32>
    %36 = arith.mulf %35, %34 : vector<8x128xf32>
    %37 = vector.extract_strided_slice %23 {offsets = [0, 128], sizes = [8, 128], strides = [1, 1]} : vector<8x384xf32> to vector<8x128xf32>
    %38 = vector.extract_strided_slice %26 {offsets = [0, 128], sizes = [8, 128], strides = [1, 1]} : vector<8x384xf32> to vector<8x128xf32>
    %39 = arith.addf %37, %38 : vector<8x128xf32>
    %cst_28 = arith.constant 5.000000e-01 : f32
    %40 = vector.broadcast %cst_28 : f32 to vector<8x128xf32>
    %41 = arith.mulf %40, %39 : vector<8x128xf32>
    %42 = math.tanh %41 : vector<8x128xf32>
    %cst_29 = arith.constant 1.000000e+00 : f32
    %43 = vector.broadcast %cst_29 : f32 to vector<8x128xf32>
    %44 = arith.addf %42, %43 : vector<8x128xf32>
    %cst_30 = arith.constant 5.000000e-01 : f32
    %45 = vector.broadcast %cst_30 : f32 to vector<8x128xf32>
    %46 = arith.mulf %45, %44 : vector<8x128xf32>
    %47 = vector.extract_strided_slice %23 {offsets = [0, 256], sizes = [8, 128], strides = [1, 1]} : vector<8x384xf32> to vector<8x128xf32>
    %48 = vector.extract_strided_slice %26 {offsets = [0, 256], sizes = [8, 128], strides = [1, 1]} : vector<8x384xf32> to vector<8x128xf32>
    %49 = arith.mulf %36, %48 : vector<8x128xf32>
    %50 = arith.addf %47, %49 : vector<8x128xf32>
    %51 = math.tanh %50 : vector<8x128xf32>
    %52 = vector.broadcast %20 : i32 to vector<8x1xi32>
    %53 = arith.cmpi slt, %52, %3 : vector<8x1xi32>
    %54 = arith.extui %53 : vector<8x1xi1> to vector<8x1xi32>
    %55 = arith.sitofp %54 : vector<8x1xi32> to vector<8x1xf32>
    %cst_31 = arith.constant 1.000000e+00 : f32
    %56 = vector.broadcast %cst_31 : f32 to vector<8x128xf32>
    %57 = arith.subf %56, %46 : vector<8x128xf32>
    %58 = vector.broadcast %55 : vector<8x1xf32> to vector<8x128xf32>
    %59 = arith.mulf %58, %57 : vector<8x128xf32>
    %60 = arith.subf %51, %8 : vector<8x128xf32>
    %61 = arith.mulf %59, %60 : vector<8x128xf32>
    %62 = arith.addf %8, %61 : vector<8x128xf32>
    %63 = arith.index_cast %20 : i32 to index
    %c0_32 = arith.constant 0 : index
    %c0_33 = arith.constant 0 : index
    %64 = vector.load %arg8[%63, %c0_32, %c0_33] : memref<8x8x128xf32, #tpu.memory_space<vmem>>, vector<1x8x128xf32>
    %65 = vector.shape_cast %64 : vector<1x8x128xf32> to vector<8x128xf32>
    %66 = vector.shape_cast %62 : vector<8x128xf32> to vector<1x8x128xf32>
    tpu.vector_store %arg8[%63, %c0_32, %c0_33], %66 {strides = array<i32>} : memref<8x8x128xf32, #tpu.memory_space<vmem>>, vector<1x8x128xf32>,
    %c1_i32 = arith.constant 1 : i32
    %c0_i32_34 = arith.constant 0 : i32
    %67 = arith.addi %c0_i32_34, %c1_i32 : i32
    %68 = arith.index_cast %c1_i32 : i32 to index
    %c0_35 = arith.constant 0 : index
    %c0_36 = arith.constant 0 : index
    %69 = vector.load %arg9[%68, %c0_35, %c0_36] : memref<8x8x384xf32, #tpu.memory_space<vmem>>, vector<1x8x384xf32>
    %70 = vector.shape_cast %69 : vector<1x8x384xf32> to vector<8x384xf32>
    %cst_37 = arith.constant dense<0.000000e+00> : vector<8x384xf32>
    %71 = tpu.matmul %62, %19, %cst_37 {dimension_numbers = #tpu.dot_dimension_numbers<[1], [0], [0], [1], [0, 0, 1, 1], [], []>} : vector<8x128xf32>, vector<128x384xf32>, vector<8x384xf32> -> vector<8x384xf32>
    %72 = vector.broadcast %7 : vector<1x384xf32> to vector<8x384xf32>
    %73 = arith.addf %71, %72 : vector<8x384xf32>
    %74 = vector.extract_strided_slice %70 {offsets = [0, 0], sizes = [8, 128], strides = [1, 1]} : vector<8x384xf32> to vector<8x128xf32>
    %75 = vector.extract_strided_slice %73 {offsets = [0, 0], sizes = [8, 128], strides = [1, 1]} : vector<8x384xf32> to vector<8x128xf32>
    %76 = arith.addf %74, %75 : vector<8x128xf32>
    %cst_38 = arith.constant 5.000000e-01 : f32
    %77 = vector.broadcast %cst_38 : f32 to vector<8x128xf32>
    %78 = arith.mulf %77, %76 : vector<8x128xf32>
    %79 = math.tanh %78 : vector<8x128xf32>
    %cst_39 = arith.constant 1.000000e+00 : f32
    %80 = vector.broadcast %cst_39 : f32 to vector<8x128xf32>
    %81 = arith.addf %79, %80 : vector<8x128xf32>
    %cst_40 = arith.constant 5.000000e-01 : f32
    %82 = vector.broadcast %cst_40 : f32 to vector<8x128xf32>
    %83 = arith.mulf %82, %81 : vector<8x128xf32>
    %84 = vector.extract_strided_slice %70 {offsets = [0, 128], sizes = [8, 128], strides = [1, 1]} : vector<8x384xf32> to vector<8x128xf32>
    %85 = vector.extract_strided_slice %73 {offsets = [0, 128], sizes = [8, 128], strides = [1, 1]} : vector<8x384xf32> to vector<8x128xf32>
    %86 = arith.addf %84, %85 : vector<8x128xf32>
    %cst_41 = arith.constant 5.000000e-01 : f32
    %87 = vector.broadcast %cst_41 : f32 to vector<8x128xf32>
    %88 = arith.mulf %87, %86 : vector<8x128xf32>
    %89 = math.tanh %88 : vector<8x128xf32>
    %cst_42 = arith.constant 1.000000e+00 : f32
    %90 = vector.broadcast %cst_42 : f32 to vector<8x128xf32>
    %91 = arith.addf %89, %90 : vector<8x128xf32>
    %cst_43 = arith.constant 5.000000e-01 : f32
    %92 = vector.broadcast %cst_43 : f32 to vector<8x128xf32>
    %93 = arith.mulf %92, %91 : vector<8x128xf32>
    %94 = vector.extract_strided_slice %70 {offsets = [0, 256], sizes = [8, 128], strides = [1, 1]} : vector<8x384xf32> to vector<8x128xf32>
    %95 = vector.extract_strided_slice %73 {offsets = [0, 256], sizes = [8, 128], strides = [1, 1]} : vector<8x384xf32> to vector<8x128xf32>
    %96 = arith.mulf %83, %95 : vector<8x128xf32>
    %97 = arith.addf %94, %96 : vector<8x128xf32>
    %98 = math.tanh %97 : vector<8x128xf32>
    %99 = vector.broadcast %67 : i32 to vector<8x1xi32>
    %100 = arith.cmpi slt, %99, %3 : vector<8x1xi32>
    %101 = arith.extui %100 : vector<8x1xi1> to vector<8x1xi32>
    %102 = arith.sitofp %101 : vector<8x1xi32> to vector<8x1xf32>
    %cst_44 = arith.constant 1.000000e+00 : f32
    %103 = vector.broadcast %cst_44 : f32 to vector<8x128xf32>
    %104 = arith.subf %103, %93 : vector<8x128xf32>
    %105 = vector.broadcast %102 : vector<8x1xf32> to vector<8x128xf32>
    %106 = arith.mulf %105, %104 : vector<8x128xf32>
    %107 = arith.subf %98, %62 : vector<8x128xf32>
    %108 = arith.mulf %106, %107 : vector<8x128xf32>
    %109 = arith.addf %62, %108 : vector<8x128xf32>
    %110 = arith.index_cast %67 : i32 to index
    %c0_45 = arith.constant 0 : index
    %c0_46 = arith.constant 0 : index
    %111 = vector.load %arg8[%110, %c0_45, %c0_46] : memref<8x8x128xf32, #tpu.memory_space<vmem>>, vector<1x8x128xf32>
    %112 = vector.shape_cast %111 : vector<1x8x128xf32> to vector<8x128xf32>
    %113 = vector.shape_cast %109 : vector<8x128xf32> to vector<1x8x128xf32>
    tpu.vector_store %arg8[%110, %c0_45, %c0_46], %113 {strides = array<i32>} : memref<8x8x128xf32, #tpu.memory_space<vmem>>, vector<1x8x128xf32>,
    %c2_i32 = arith.constant 2 : i32
    %c0_i32_47 = arith.constant 0 : i32
    %114 = arith.addi %c0_i32_47, %c2_i32 : i32
    %115 = arith.index_cast %c2_i32 : i32 to index
    %c0_48 = arith.constant 0 : index
    %c0_49 = arith.constant 0 : index
    %116 = vector.load %arg9[%115, %c0_48, %c0_49] : memref<8x8x384xf32, #tpu.memory_space<vmem>>, vector<1x8x384xf32>
    %117 = vector.shape_cast %116 : vector<1x8x384xf32> to vector<8x384xf32>
    %cst_50 = arith.constant dense<0.000000e+00> : vector<8x384xf32>
    %118 = tpu.matmul %109, %19, %cst_50 {dimension_numbers = #tpu.dot_dimension_numbers<[1], [0], [0], [1], [0, 0, 1, 1], [], []>} : vector<8x128xf32>, vector<128x384xf32>, vector<8x384xf32> -> vector<8x384xf32>
    %119 = vector.broadcast %7 : vector<1x384xf32> to vector<8x384xf32>
    %120 = arith.addf %118, %119 : vector<8x384xf32>
    %121 = vector.extract_strided_slice %117 {offsets = [0, 0], sizes = [8, 128], strides = [1, 1]} : vector<8x384xf32> to vector<8x128xf32>
    %122 = vector.extract_strided_slice %120 {offsets = [0, 0], sizes = [8, 128], strides = [1, 1]} : vector<8x384xf32> to vector<8x128xf32>
    %123 = arith.addf %121, %122 : vector<8x128xf32>
    %cst_51 = arith.constant 5.000000e-01 : f32
    %124 = vector.broadcast %cst_51 : f32 to vector<8x128xf32>
    %125 = arith.mulf %124, %123 : vector<8x128xf32>
    %126 = math.tanh %125 : vector<8x128xf32>
    %cst_52 = arith.constant 1.000000e+00 : f32
    %127 = vector.broadcast %cst_52 : f32 to vector<8x128xf32>
    %128 = arith.addf %126, %127 : vector<8x128xf32>
    %cst_53 = arith.constant 5.000000e-01 : f32
    %129 = vector.broadcast %cst_53 : f32 to vector<8x128xf32>
    %130 = arith.mulf %129, %128 : vector<8x128xf32>
    %131 = vector.extract_strided_slice %117 {offsets = [0, 128], sizes = [8, 128], strides = [1, 1]} : vector<8x384xf32> to vector<8x128xf32>
    %132 = vector.extract_strided_slice %120 {offsets = [0, 128], sizes = [8, 128], strides = [1, 1]} : vector<8x384xf32> to vector<8x128xf32>
    %133 = arith.addf %131, %132 : vector<8x128xf32>
    %cst_54 = arith.constant 5.000000e-01 : f32
    %134 = vector.broadcast %cst_54 : f32 to vector<8x128xf32>
    %135 = arith.mulf %134, %133 : vector<8x128xf32>
    %136 = math.tanh %135 : vector<8x128xf32>
    %cst_55 = arith.constant 1.000000e+00 : f32
    %137 = vector.broadcast %cst_55 : f32 to vector<8x128xf32>
    %138 = arith.addf %136, %137 : vector<8x128xf32>
    %cst_56 = arith.constant 5.000000e-01 : f32
    %139 = vector.broadcast %cst_56 : f32 to vector<8x128xf32>
    %140 = arith.mulf %139, %138 : vector<8x128xf32>
    %141 = vector.extract_strided_slice %117 {offsets = [0, 256], sizes = [8, 128], strides = [1, 1]} : vector<8x384xf32> to vector<8x128xf32>
    %142 = vector.extract_strided_slice %120 {offsets = [0, 256], sizes = [8, 128], strides = [1, 1]} : vector<8x384xf32> to vector<8x128xf32>
    %143 = arith.mulf %130, %142 : vector<8x128xf32>
    %144 = arith.addf %141, %143 : vector<8x128xf32>
    %145 = math.tanh %144 : vector<8x128xf32>
    %146 = vector.broadcast %114 : i32 to vector<8x1xi32>
    %147 = arith.cmpi slt, %146, %3 : vector<8x1xi32>
    %148 = arith.extui %147 : vector<8x1xi1> to vector<8x1xi32>
    %149 = arith.sitofp %148 : vector<8x1xi32> to vector<8x1xf32>
    %cst_57 = arith.constant 1.000000e+00 : f32
    %150 = vector.broadcast %cst_57 : f32 to vector<8x128xf32>
    %151 = arith.subf %150, %140 : vector<8x128xf32>
    %152 = vector.broadcast %149 : vector<8x1xf32> to vector<8x128xf32>
    %153 = arith.mulf %152, %151 : vector<8x128xf32>
    %154 = arith.subf %145, %109 : vector<8x128xf32>
    %155 = arith.mulf %153, %154 : vector<8x128xf32>
    %156 = arith.addf %109, %155 : vector<8x128xf32>
    %157 = arith.index_cast %114 : i32 to index
    %c0_58 = arith.constant 0 : index
    %c0_59 = arith.constant 0 : index
    %158 = vector.load %arg8[%157, %c0_58, %c0_59] : memref<8x8x128xf32, #tpu.memory_space<vmem>>, vector<1x8x128xf32>
    %159 = vector.shape_cast %158 : vector<1x8x128xf32> to vector<8x128xf32>
    %160 = vector.shape_cast %156 : vector<8x128xf32> to vector<1x8x128xf32>
    tpu.vector_store %arg8[%157, %c0_58, %c0_59], %160 {strides = array<i32>} : memref<8x8x128xf32, #tpu.memory_space<vmem>>, vector<1x8x128xf32>,
    %c3_i32 = arith.constant 3 : i32
    %c0_i32_60 = arith.constant 0 : i32
    %161 = arith.addi %c0_i32_60, %c3_i32 : i32
    %162 = arith.index_cast %c3_i32 : i32 to index
    %c0_61 = arith.constant 0 : index
    %c0_62 = arith.constant 0 : index
    %163 = vector.load %arg9[%162, %c0_61, %c0_62] : memref<8x8x384xf32, #tpu.memory_space<vmem>>, vector<1x8x384xf32>
    %164 = vector.shape_cast %163 : vector<1x8x384xf32> to vector<8x384xf32>
    %cst_63 = arith.constant dense<0.000000e+00> : vector<8x384xf32>
    %165 = tpu.matmul %156, %19, %cst_63 {dimension_numbers = #tpu.dot_dimension_numbers<[1], [0], [0], [1], [0, 0, 1, 1], [], []>} : vector<8x128xf32>, vector<128x384xf32>, vector<8x384xf32> -> vector<8x384xf32>
    %166 = vector.broadcast %7 : vector<1x384xf32> to vector<8x384xf32>
    %167 = arith.addf %165, %166 : vector<8x384xf32>
    %168 = vector.extract_strided_slice %164 {offsets = [0, 0], sizes = [8, 128], strides = [1, 1]} : vector<8x384xf32> to vector<8x128xf32>
    %169 = vector.extract_strided_slice %167 {offsets = [0, 0], sizes = [8, 128], strides = [1, 1]} : vector<8x384xf32> to vector<8x128xf32>
    %170 = arith.addf %168, %169 : vector<8x128xf32>
    %cst_64 = arith.constant 5.000000e-01 : f32
    %171 = vector.broadcast %cst_64 : f32 to vector<8x128xf32>
    %172 = arith.mulf %171, %170 : vector<8x128xf32>
    %173 = math.tanh %172 : vector<8x128xf32>
    %cst_65 = arith.constant 1.000000e+00 : f32
    %174 = vector.broadcast %cst_65 : f32 to vector<8x128xf32>
    %175 = arith.addf %173, %174 : vector<8x128xf32>
    %cst_66 = arith.constant 5.000000e-01 : f32
    %176 = vector.broadcast %cst_66 : f32 to vector<8x128xf32>
    %177 = arith.mulf %176, %175 : vector<8x128xf32>
    %178 = vector.extract_strided_slice %164 {offsets = [0, 128], sizes = [8, 128], strides = [1, 1]} : vector<8x384xf32> to vector<8x128xf32>
    %179 = vector.extract_strided_slice %167 {offsets = [0, 128], sizes = [8, 128], strides = [1, 1]} : vector<8x384xf32> to vector<8x128xf32>
    %180 = arith.addf %178, %179 : vector<8x128xf32>
    %cst_67 = arith.constant 5.000000e-01 : f32
    %181 = vector.broadcast %cst_67 : f32 to vector<8x128xf32>
    %182 = arith.mulf %181, %180 : vector<8x128xf32>
    %183 = math.tanh %182 : vector<8x128xf32>
    %cst_68 = arith.constant 1.000000e+00 : f32
    %184 = vector.broadcast %cst_68 : f32 to vector<8x128xf32>
    %185 = arith.addf %183, %184 : vector<8x128xf32>
    %cst_69 = arith.constant 5.000000e-01 : f32
    %186 = vector.broadcast %cst_69 : f32 to vector<8x128xf32>
    %187 = arith.mulf %186, %185 : vector<8x128xf32>
    %188 = vector.extract_strided_slice %164 {offsets = [0, 256], sizes = [8, 128], strides = [1, 1]} : vector<8x384xf32> to vector<8x128xf32>
    %189 = vector.extract_strided_slice %167 {offsets = [0, 256], sizes = [8, 128], strides = [1, 1]} : vector<8x384xf32> to vector<8x128xf32>
    %190 = arith.mulf %177, %189 : vector<8x128xf32>
    %191 = arith.addf %188, %190 : vector<8x128xf32>
    %192 = math.tanh %191 : vector<8x128xf32>
    %193 = vector.broadcast %161 : i32 to vector<8x1xi32>
    %194 = arith.cmpi slt, %193, %3 : vector<8x1xi32>
    %195 = arith.extui %194 : vector<8x1xi1> to vector<8x1xi32>
    %196 = arith.sitofp %195 : vector<8x1xi32> to vector<8x1xf32>
    %cst_70 = arith.constant 1.000000e+00 : f32
    %197 = vector.broadcast %cst_70 : f32 to vector<8x128xf32>
    %198 = arith.subf %197, %187 : vector<8x128xf32>
    %199 = vector.broadcast %196 : vector<8x1xf32> to vector<8x128xf32>
    %200 = arith.mulf %199, %198 : vector<8x128xf32>
    %201 = arith.subf %192, %156 : vector<8x128xf32>
    %202 = arith.mulf %200, %201 : vector<8x128xf32>
    %203 = arith.addf %156, %202 : vector<8x128xf32>
    %204 = arith.index_cast %161 : i32 to index
    %c0_71 = arith.constant 0 : index
    %c0_72 = arith.constant 0 : index
    %205 = vector.load %arg8[%204, %c0_71, %c0_72] : memref<8x8x128xf32, #tpu.memory_space<vmem>>, vector<1x8x128xf32>
    %206 = vector.shape_cast %205 : vector<1x8x128xf32> to vector<8x128xf32>
    %207 = vector.shape_cast %203 : vector<8x128xf32> to vector<1x8x128xf32>
    tpu.vector_store %arg8[%204, %c0_71, %c0_72], %207 {strides = array<i32>} : memref<8x8x128xf32, #tpu.memory_space<vmem>>, vector<1x8x128xf32>,
    %c4_i32 = arith.constant 4 : i32
    %c0_i32_73 = arith.constant 0 : i32
    %208 = arith.addi %c0_i32_73, %c4_i32 : i32
    %209 = arith.index_cast %c4_i32 : i32 to index
    %c0_74 = arith.constant 0 : index
    %c0_75 = arith.constant 0 : index
    %210 = vector.load %arg9[%209, %c0_74, %c0_75] : memref<8x8x384xf32, #tpu.memory_space<vmem>>, vector<1x8x384xf32>
    %211 = vector.shape_cast %210 : vector<1x8x384xf32> to vector<8x384xf32>
    %cst_76 = arith.constant dense<0.000000e+00> : vector<8x384xf32>
    %212 = tpu.matmul %203, %19, %cst_76 {dimension_numbers = #tpu.dot_dimension_numbers<[1], [0], [0], [1], [0, 0, 1, 1], [], []>} : vector<8x128xf32>, vector<128x384xf32>, vector<8x384xf32> -> vector<8x384xf32>
    %213 = vector.broadcast %7 : vector<1x384xf32> to vector<8x384xf32>
    %214 = arith.addf %212, %213 : vector<8x384xf32>
    %215 = vector.extract_strided_slice %211 {offsets = [0, 0], sizes = [8, 128], strides = [1, 1]} : vector<8x384xf32> to vector<8x128xf32>
    %216 = vector.extract_strided_slice %214 {offsets = [0, 0], sizes = [8, 128], strides = [1, 1]} : vector<8x384xf32> to vector<8x128xf32>
    %217 = arith.addf %215, %216 : vector<8x128xf32>
    %cst_77 = arith.constant 5.000000e-01 : f32
    %218 = vector.broadcast %cst_77 : f32 to vector<8x128xf32>
    %219 = arith.mulf %218, %217 : vector<8x128xf32>
    %220 = math.tanh %219 : vector<8x128xf32>
    %cst_78 = arith.constant 1.000000e+00 : f32
    %221 = vector.broadcast %cst_78 : f32 to vector<8x128xf32>
    %222 = arith.addf %220, %221 : vector<8x128xf32>
    %cst_79 = arith.constant 5.000000e-01 : f32
    %223 = vector.broadcast %cst_79 : f32 to vector<8x128xf32>
    %224 = arith.mulf %223, %222 : vector<8x128xf32>
    %225 = vector.extract_strided_slice %211 {offsets = [0, 128], sizes = [8, 128], strides = [1, 1]} : vector<8x384xf32> to vector<8x128xf32>
    %226 = vector.extract_strided_slice %214 {offsets = [0, 128], sizes = [8, 128], strides = [1, 1]} : vector<8x384xf32> to vector<8x128xf32>
    %227 = arith.addf %225, %226 : vector<8x128xf32>
    %cst_80 = arith.constant 5.000000e-01 : f32
    %228 = vector.broadcast %cst_80 : f32 to vector<8x128xf32>
    %229 = arith.mulf %228, %227 : vector<8x128xf32>
    %230 = math.tanh %229 : vector<8x128xf32>
    %cst_81 = arith.constant 1.000000e+00 : f32
    %231 = vector.broadcast %cst_81 : f32 to vector<8x128xf32>
    %232 = arith.addf %230, %231 : vector<8x128xf32>
    %cst_82 = arith.constant 5.000000e-01 : f32
    %233 = vector.broadcast %cst_82 : f32 to vector<8x128xf32>
    %234 = arith.mulf %233, %232 : vector<8x128xf32>
    %235 = vector.extract_strided_slice %211 {offsets = [0, 256], sizes = [8, 128], strides = [1, 1]} : vector<8x384xf32> to vector<8x128xf32>
    %236 = vector.extract_strided_slice %214 {offsets = [0, 256], sizes = [8, 128], strides = [1, 1]} : vector<8x384xf32> to vector<8x128xf32>
    %237 = arith.mulf %224, %236 : vector<8x128xf32>
    %238 = arith.addf %235, %237 : vector<8x128xf32>
    %239 = math.tanh %238 : vector<8x128xf32>
    %240 = vector.broadcast %208 : i32 to vector<8x1xi32>
    %241 = arith.cmpi slt, %240, %3 : vector<8x1xi32>
    %242 = arith.extui %241 : vector<8x1xi1> to vector<8x1xi32>
    %243 = arith.sitofp %242 : vector<8x1xi32> to vector<8x1xf32>
    %cst_83 = arith.constant 1.000000e+00 : f32
    %244 = vector.broadcast %cst_83 : f32 to vector<8x128xf32>
    %245 = arith.subf %244, %234 : vector<8x128xf32>
    %246 = vector.broadcast %243 : vector<8x1xf32> to vector<8x128xf32>
    %247 = arith.mulf %246, %245 : vector<8x128xf32>
    %248 = arith.subf %239, %203 : vector<8x128xf32>
    %249 = arith.mulf %247, %248 : vector<8x128xf32>
    %250 = arith.addf %203, %249 : vector<8x128xf32>
    %251 = arith.index_cast %208 : i32 to index
    %c0_84 = arith.constant 0 : index
    %c0_85 = arith.constant 0 : index
    %252 = vector.load %arg8[%251, %c0_84, %c0_85] : memref<8x8x128xf32, #tpu.memory_space<vmem>>, vector<1x8x128xf32>
    %253 = vector.shape_cast %252 : vector<1x8x128xf32> to vector<8x128xf32>
    %254 = vector.shape_cast %250 : vector<8x128xf32> to vector<1x8x128xf32>
    tpu.vector_store %arg8[%251, %c0_84, %c0_85], %254 {strides = array<i32>} : memref<8x8x128xf32, #tpu.memory_space<vmem>>, vector<1x8x128xf32>,
    %c5_i32 = arith.constant 5 : i32
    %c0_i32_86 = arith.constant 0 : i32
    %255 = arith.addi %c0_i32_86, %c5_i32 : i32
    %256 = arith.index_cast %c5_i32 : i32 to index
    %c0_87 = arith.constant 0 : index
    %c0_88 = arith.constant 0 : index
    %257 = vector.load %arg9[%256, %c0_87, %c0_88] : memref<8x8x384xf32, #tpu.memory_space<vmem>>, vector<1x8x384xf32>
    %258 = vector.shape_cast %257 : vector<1x8x384xf32> to vector<8x384xf32>
    %cst_89 = arith.constant dense<0.000000e+00> : vector<8x384xf32>
    %259 = tpu.matmul %250, %19, %cst_89 {dimension_numbers = #tpu.dot_dimension_numbers<[1], [0], [0], [1], [0, 0, 1, 1], [], []>} : vector<8x128xf32>, vector<128x384xf32>, vector<8x384xf32> -> vector<8x384xf32>
    %260 = vector.broadcast %7 : vector<1x384xf32> to vector<8x384xf32>
    %261 = arith.addf %259, %260 : vector<8x384xf32>
    %262 = vector.extract_strided_slice %258 {offsets = [0, 0], sizes = [8, 128], strides = [1, 1]} : vector<8x384xf32> to vector<8x128xf32>
    %263 = vector.extract_strided_slice %261 {offsets = [0, 0], sizes = [8, 128], strides = [1, 1]} : vector<8x384xf32> to vector<8x128xf32>
    %264 = arith.addf %262, %263 : vector<8x128xf32>
    %cst_90 = arith.constant 5.000000e-01 : f32
    %265 = vector.broadcast %cst_90 : f32 to vector<8x128xf32>
    %266 = arith.mulf %265, %264 : vector<8x128xf32>
    %267 = math.tanh %266 : vector<8x128xf32>
    %cst_91 = arith.constant 1.000000e+00 : f32
    %268 = vector.broadcast %cst_91 : f32 to vector<8x128xf32>
    %269 = arith.addf %267, %268 : vector<8x128xf32>
    %cst_92 = arith.constant 5.000000e-01 : f32
    %270 = vector.broadcast %cst_92 : f32 to vector<8x128xf32>
    %271 = arith.mulf %270, %269 : vector<8x128xf32>
    %272 = vector.extract_strided_slice %258 {offsets = [0, 128], sizes = [8, 128], strides = [1, 1]} : vector<8x384xf32> to vector<8x128xf32>
    %273 = vector.extract_strided_slice %261 {offsets = [0, 128], sizes = [8, 128], strides = [1, 1]} : vector<8x384xf32> to vector<8x128xf32>
    %274 = arith.addf %272, %273 : vector<8x128xf32>
    %cst_93 = arith.constant 5.000000e-01 : f32
    %275 = vector.broadcast %cst_93 : f32 to vector<8x128xf32>
    %276 = arith.mulf %275, %274 : vector<8x128xf32>
    %277 = math.tanh %276 : vector<8x128xf32>
    %cst_94 = arith.constant 1.000000e+00 : f32
    %278 = vector.broadcast %cst_94 : f32 to vector<8x128xf32>
    %279 = arith.addf %277, %278 : vector<8x128xf32>
    %cst_95 = arith.constant 5.000000e-01 : f32
    %280 = vector.broadcast %cst_95 : f32 to vector<8x128xf32>
    %281 = arith.mulf %280, %279 : vector<8x128xf32>
    %282 = vector.extract_strided_slice %258 {offsets = [0, 256], sizes = [8, 128], strides = [1, 1]} : vector<8x384xf32> to vector<8x128xf32>
    %283 = vector.extract_strided_slice %261 {offsets = [0, 256], sizes = [8, 128], strides = [1, 1]} : vector<8x384xf32> to vector<8x128xf32>
    %284 = arith.mulf %271, %283 : vector<8x128xf32>
    %285 = arith.addf %282, %284 : vector<8x128xf32>
    %286 = math.tanh %285 : vector<8x128xf32>
    %287 = vector.broadcast %255 : i32 to vector<8x1xi32>
    %288 = arith.cmpi slt, %287, %3 : vector<8x1xi32>
    %289 = arith.extui %288 : vector<8x1xi1> to vector<8x1xi32>
    %290 = arith.sitofp %289 : vector<8x1xi32> to vector<8x1xf32>
    %cst_96 = arith.constant 1.000000e+00 : f32
    %291 = vector.broadcast %cst_96 : f32 to vector<8x128xf32>
    %292 = arith.subf %291, %281 : vector<8x128xf32>
    %293 = vector.broadcast %290 : vector<8x1xf32> to vector<8x128xf32>
    %294 = arith.mulf %293, %292 : vector<8x128xf32>
    %295 = arith.subf %286, %250 : vector<8x128xf32>
    %296 = arith.mulf %294, %295 : vector<8x128xf32>
    %297 = arith.addf %250, %296 : vector<8x128xf32>
    %298 = arith.index_cast %255 : i32 to index
    %c0_97 = arith.constant 0 : index
    %c0_98 = arith.constant 0 : index
    %299 = vector.load %arg8[%298, %c0_97, %c0_98] : memref<8x8x128xf32, #tpu.memory_space<vmem>>, vector<1x8x128xf32>
    %300 = vector.shape_cast %299 : vector<1x8x128xf32> to vector<8x128xf32>
    %301 = vector.shape_cast %297 : vector<8x128xf32> to vector<1x8x128xf32>
    tpu.vector_store %arg8[%298, %c0_97, %c0_98], %301 {strides = array<i32>} : memref<8x8x128xf32, #tpu.memory_space<vmem>>, vector<1x8x128xf32>,
    %c6_i32 = arith.constant 6 : i32
    %c0_i32_99 = arith.constant 0 : i32
    %302 = arith.addi %c0_i32_99, %c6_i32 : i32
    %303 = arith.index_cast %c6_i32 : i32 to index
    %c0_100 = arith.constant 0 : index
    %c0_101 = arith.constant 0 : index
    %304 = vector.load %arg9[%303, %c0_100, %c0_101] : memref<8x8x384xf32, #tpu.memory_space<vmem>>, vector<1x8x384xf32>
    %305 = vector.shape_cast %304 : vector<1x8x384xf32> to vector<8x384xf32>
    %cst_102 = arith.constant dense<0.000000e+00> : vector<8x384xf32>
    %306 = tpu.matmul %297, %19, %cst_102 {dimension_numbers = #tpu.dot_dimension_numbers<[1], [0], [0], [1], [0, 0, 1, 1], [], []>} : vector<8x128xf32>, vector<128x384xf32>, vector<8x384xf32> -> vector<8x384xf32>
    %307 = vector.broadcast %7 : vector<1x384xf32> to vector<8x384xf32>
    %308 = arith.addf %306, %307 : vector<8x384xf32>
    %309 = vector.extract_strided_slice %305 {offsets = [0, 0], sizes = [8, 128], strides = [1, 1]} : vector<8x384xf32> to vector<8x128xf32>
    %310 = vector.extract_strided_slice %308 {offsets = [0, 0], sizes = [8, 128], strides = [1, 1]} : vector<8x384xf32> to vector<8x128xf32>
    %311 = arith.addf %309, %310 : vector<8x128xf32>
    %cst_103 = arith.constant 5.000000e-01 : f32
    %312 = vector.broadcast %cst_103 : f32 to vector<8x128xf32>
    %313 = arith.mulf %312, %311 : vector<8x128xf32>
    %314 = math.tanh %313 : vector<8x128xf32>
    %cst_104 = arith.constant 1.000000e+00 : f32
    %315 = vector.broadcast %cst_104 : f32 to vector<8x128xf32>
    %316 = arith.addf %314, %315 : vector<8x128xf32>
    %cst_105 = arith.constant 5.000000e-01 : f32
    %317 = vector.broadcast %cst_105 : f32 to vector<8x128xf32>
    %318 = arith.mulf %317, %316 : vector<8x128xf32>
    %319 = vector.extract_strided_slice %305 {offsets = [0, 128], sizes = [8, 128], strides = [1, 1]} : vector<8x384xf32> to vector<8x128xf32>
    %320 = vector.extract_strided_slice %308 {offsets = [0, 128], sizes = [8, 128], strides = [1, 1]} : vector<8x384xf32> to vector<8x128xf32>
    %321 = arith.addf %319, %320 : vector<8x128xf32>
    %cst_106 = arith.constant 5.000000e-01 : f32
    %322 = vector.broadcast %cst_106 : f32 to vector<8x128xf32>
    %323 = arith.mulf %322, %321 : vector<8x128xf32>
    %324 = math.tanh %323 : vector<8x128xf32>
    %cst_107 = arith.constant 1.000000e+00 : f32
    %325 = vector.broadcast %cst_107 : f32 to vector<8x128xf32>
    %326 = arith.addf %324, %325 : vector<8x128xf32>
    %cst_108 = arith.constant 5.000000e-01 : f32
    %327 = vector.broadcast %cst_108 : f32 to vector<8x128xf32>
    %328 = arith.mulf %327, %326 : vector<8x128xf32>
    %329 = vector.extract_strided_slice %305 {offsets = [0, 256], sizes = [8, 128], strides = [1, 1]} : vector<8x384xf32> to vector<8x128xf32>
    %330 = vector.extract_strided_slice %308 {offsets = [0, 256], sizes = [8, 128], strides = [1, 1]} : vector<8x384xf32> to vector<8x128xf32>
    %331 = arith.mulf %318, %330 : vector<8x128xf32>
    %332 = arith.addf %329, %331 : vector<8x128xf32>
    %333 = math.tanh %332 : vector<8x128xf32>
    %334 = vector.broadcast %302 : i32 to vector<8x1xi32>
    %335 = arith.cmpi slt, %334, %3 : vector<8x1xi32>
    %336 = arith.extui %335 : vector<8x1xi1> to vector<8x1xi32>
    %337 = arith.sitofp %336 : vector<8x1xi32> to vector<8x1xf32>
    %cst_109 = arith.constant 1.000000e+00 : f32
    %338 = vector.broadcast %cst_109 : f32 to vector<8x128xf32>
    %339 = arith.subf %338, %328 : vector<8x128xf32>
    %340 = vector.broadcast %337 : vector<8x1xf32> to vector<8x128xf32>
    %341 = arith.mulf %340, %339 : vector<8x128xf32>
    %342 = arith.subf %333, %297 : vector<8x128xf32>
    %343 = arith.mulf %341, %342 : vector<8x128xf32>
    %344 = arith.addf %297, %343 : vector<8x128xf32>
    %345 = arith.index_cast %302 : i32 to index
    %c0_110 = arith.constant 0 : index
    %c0_111 = arith.constant 0 : index
    %346 = vector.load %arg8[%345, %c0_110, %c0_111] : memref<8x8x128xf32, #tpu.memory_space<vmem>>, vector<1x8x128xf32>
    %347 = vector.shape_cast %346 : vector<1x8x128xf32> to vector<8x128xf32>
    %348 = vector.shape_cast %344 : vector<8x128xf32> to vector<1x8x128xf32>
    tpu.vector_store %arg8[%345, %c0_110, %c0_111], %348 {strides = array<i32>} : memref<8x8x128xf32, #tpu.memory_space<vmem>>, vector<1x8x128xf32>,
    %c7_i32 = arith.constant 7 : i32
    %c0_i32_112 = arith.constant 0 : i32
    %349 = arith.addi %c0_i32_112, %c7_i32 : i32
    %350 = arith.index_cast %c7_i32 : i32 to index
    %c0_113 = arith.constant 0 : index
    %c0_114 = arith.constant 0 : index
    %351 = vector.load %arg9[%350, %c0_113, %c0_114] : memref<8x8x384xf32, #tpu.memory_space<vmem>>, vector<1x8x384xf32>
    %352 = vector.shape_cast %351 : vector<1x8x384xf32> to vector<8x384xf32>
    %cst_115 = arith.constant dense<0.000000e+00> : vector<8x384xf32>
    %353 = tpu.matmul %344, %19, %cst_115 {dimension_numbers = #tpu.dot_dimension_numbers<[1], [0], [0], [1], [0, 0, 1, 1], [], []>} : vector<8x128xf32>, vector<128x384xf32>, vector<8x384xf32> -> vector<8x384xf32>
    %354 = vector.broadcast %7 : vector<1x384xf32> to vector<8x384xf32>
    %355 = arith.addf %353, %354 : vector<8x384xf32>
    %356 = vector.extract_strided_slice %352 {offsets = [0, 0], sizes = [8, 128], strides = [1, 1]} : vector<8x384xf32> to vector<8x128xf32>
    %357 = vector.extract_strided_slice %355 {offsets = [0, 0], sizes = [8, 128], strides = [1, 1]} : vector<8x384xf32> to vector<8x128xf32>
    %358 = arith.addf %356, %357 : vector<8x128xf32>
    %cst_116 = arith.constant 5.000000e-01 : f32
    %359 = vector.broadcast %cst_116 : f32 to vector<8x128xf32>
    %360 = arith.mulf %359, %358 : vector<8x128xf32>
    %361 = math.tanh %360 : vector<8x128xf32>
    %cst_117 = arith.constant 1.000000e+00 : f32
    %362 = vector.broadcast %cst_117 : f32 to vector<8x128xf32>
    %363 = arith.addf %361, %362 : vector<8x128xf32>
    %cst_118 = arith.constant 5.000000e-01 : f32
    %364 = vector.broadcast %cst_118 : f32 to vector<8x128xf32>
    %365 = arith.mulf %364, %363 : vector<8x128xf32>
    %366 = vector.extract_strided_slice %352 {offsets = [0, 128], sizes = [8, 128], strides = [1, 1]} : vector<8x384xf32> to vector<8x128xf32>
    %367 = vector.extract_strided_slice %355 {offsets = [0, 128], sizes = [8, 128], strides = [1, 1]} : vector<8x384xf32> to vector<8x128xf32>
    %368 = arith.addf %366, %367 : vector<8x128xf32>
    %cst_119 = arith.constant 5.000000e-01 : f32
    %369 = vector.broadcast %cst_119 : f32 to vector<8x128xf32>
    %370 = arith.mulf %369, %368 : vector<8x128xf32>
    %371 = math.tanh %370 : vector<8x128xf32>
    %cst_120 = arith.constant 1.000000e+00 : f32
    %372 = vector.broadcast %cst_120 : f32 to vector<8x128xf32>
    %373 = arith.addf %371, %372 : vector<8x128xf32>
    %cst_121 = arith.constant 5.000000e-01 : f32
    %374 = vector.broadcast %cst_121 : f32 to vector<8x128xf32>
    %375 = arith.mulf %374, %373 : vector<8x128xf32>
    %376 = vector.extract_strided_slice %352 {offsets = [0, 256], sizes = [8, 128], strides = [1, 1]} : vector<8x384xf32> to vector<8x128xf32>
    %377 = vector.extract_strided_slice %355 {offsets = [0, 256], sizes = [8, 128], strides = [1, 1]} : vector<8x384xf32> to vector<8x128xf32>
    %378 = arith.mulf %365, %377 : vector<8x128xf32>
    %379 = arith.addf %376, %378 : vector<8x128xf32>
    %380 = math.tanh %379 : vector<8x128xf32>
    %381 = vector.broadcast %349 : i32 to vector<8x1xi32>
    %382 = arith.cmpi slt, %381, %3 : vector<8x1xi32>
    %383 = arith.extui %382 : vector<8x1xi1> to vector<8x1xi32>
    %384 = arith.sitofp %383 : vector<8x1xi32> to vector<8x1xf32>
    %cst_122 = arith.constant 1.000000e+00 : f32
    %385 = vector.broadcast %cst_122 : f32 to vector<8x128xf32>
    %386 = arith.subf %385, %375 : vector<8x128xf32>
    %387 = vector.broadcast %384 : vector<8x1xf32> to vector<8x128xf32>
    %388 = arith.mulf %387, %386 : vector<8x128xf32>
    %389 = arith.subf %380, %344 : vector<8x128xf32>
    %390 = arith.mulf %388, %389 : vector<8x128xf32>
    %391 = arith.addf %344, %390 : vector<8x128xf32>
    %392 = arith.index_cast %349 : i32 to index
    %c0_123 = arith.constant 0 : index
    %c0_124 = arith.constant 0 : index
    %393 = vector.load %arg8[%392, %c0_123, %c0_124] : memref<8x8x128xf32, #tpu.memory_space<vmem>>, vector<1x8x128xf32>
    %394 = vector.shape_cast %393 : vector<1x8x128xf32> to vector<8x128xf32>
    %395 = vector.shape_cast %391 : vector<8x128xf32> to vector<1x8x128xf32>
    tpu.vector_store %arg8[%392, %c0_123, %c0_124], %395 {strides = array<i32>} : memref<8x8x128xf32, #tpu.memory_space<vmem>>, vector<1x8x128xf32>,
    %c8_i32 = arith.constant 8 : i32
    %c0_125 = arith.constant 0 : index
    %c0_126 = arith.constant 0 : index
    %c0_127 = arith.constant 0 : index
    %396 = vector.load %arg7[%c0_125, %c0_126, %c0_127] : memref<1x8x128xf32, #tpu.memory_space<vmem>>, vector<1x8x128xf32>
    %397 = vector.shape_cast %396 : vector<1x8x128xf32> to vector<8x128xf32>
    %398 = vector.shape_cast %391 : vector<8x128xf32> to vector<1x8x128xf32>
    tpu.vector_store %arg7[%c0_125, %c0_126, %c0_127], %398 {strides = array<i32>} : memref<1x8x128xf32, #tpu.memory_space<vmem>>, vector<1x8x128xf32>,
    %c1_i32_128 = arith.constant 1 : i32
    %399 = arith.cmpi eq, %arg0, %c1_i32_128 : i32
    %400 = arith.extui %399 : i1 to i32
    %c0_i32_129 = arith.constant 0 : i32
    %401 = arith.cmpi ne, %400, %c0_i32_129 : i32
    scf.if %401 {
      %c0_130 = arith.constant 0 : index
      %c0_131 = arith.constant 0 : index
      %c0_132 = arith.constant 0 : index
      %402 = vector.load %arg8[%c0_130, %c0_131, %c0_132] : memref<8x8x128xf32, #tpu.memory_space<vmem>>, vector<8x8x128xf32>
      %403 = tpu.iota {dimensions = array<i32: 0>} : vector<8x8x128xi32>
      %404 = vector.shape_cast %3 : vector<8x1xi32> to vector<1x8x1xi32>
      %405 = vector.shape_cast %404 : vector<1x8x1xi32> to vector<1x8x1xi32>
      %406 = vector.broadcast %405 : vector<1x8x1xi32> to vector<8x8x128xi32>
      %407 = arith.cmpi slt, %403, %406 : vector<8x8x128xi32>
      %cst_133 = arith.constant 0.000000e+00 : f32
      %408 = vector.broadcast %cst_133 : f32 to vector<8x8x128xf32>
      %409 = arith.select %407, %402, %408 : vector<8x8x128xi1>, vector<8x8x128xf32>
      %c0_134 = arith.constant 0 : index
      %c0_135 = arith.constant 0 : index
      %c0_136 = arith.constant 0 : index
      %410 = vector.load %arg6[%c0_134, %c0_135, %c0_136] : memref<8x8x128xf32, #tpu.memory_space<vmem>>, vector<8x8x128xf32>
      tpu.vector_store %arg6[%c0_134, %c0_135, %c0_136], %409 {strides = array<i32>} : memref<8x8x128xf32, #tpu.memory_space<vmem>>, vector<8x8x128xf32>,
    } else {
    }
    return
  }
  func.func @transform_1(%arg0: i32) -> (i32, i32) {
    %c0_i32 = arith.constant 0 : i32
    %c0_i32_0 = arith.constant 0 : i32
    %c0_i32_1 = arith.constant 0 : i32
    return %c0_i32, %c0_i32_0 : i32, i32
  }
  func.func @transform_2(%arg0: i32) -> (i32, i32, i32) {
    %c0_i32 = arith.constant 0 : i32
    %c0_i32_0 = arith.constant 0 : i32
    %c0_i32_1 = arith.constant 0 : i32
    return %arg0, %c0_i32, %c0_i32_0 : i32, i32, i32
  }
  func.func @transform_3(%arg0: i32) -> (i32, i32, i32) {
    %c0_i32 = arith.constant 0 : i32
    %c0_i32_0 = arith.constant 0 : i32
    %c0_i32_1 = arith.constant 0 : i32
    return %arg0, %c0_i32, %c0_i32_0 : i32, i32, i32
  }
  func.func @transform_4(%arg0: i32) -> (i32, i32, i32) {
    %c0_i32 = arith.constant 0 : i32
    %c0_i32_0 = arith.constant 0 : i32
    %c0_i32_1 = arith.constant 0 : i32
    return %arg0, %c0_i32, %c0_i32_0 : i32, i32, i32
  }
  func.func @transform_5(%arg0: i32) -> (i32, i32, i32) {
    %c0_i32 = arith.constant 0 : i32
    %c0_i32_0 = arith.constant 0 : i32
    %c0_i32_1 = arith.constant 0 : i32
    %c0_i32_2 = arith.constant 0 : i32
    return %c0_i32, %c0_i32_0, %c0_i32_1 : i32, i32, i32
  }
  func.func @transform_6(%arg0: i32) -> (i32, i32, i32) {
    %c0_i32 = arith.constant 0 : i32
    %c0_i32_0 = arith.constant 0 : i32
    %c0_i32_1 = arith.constant 0 : i32
    return %arg0, %c0_i32, %c0_i32_0 : i32, i32, i32
  }
}

</mosaic_0001>

<llo_original>
// kernel: tpu_custom_call.1
$region0: #{tpu_custom_call.1}
  #allocation0 [shape = 'u32[]', space=smem, size = 0x4, offset = 0x4, fixed_abs, tag = 'smem constant byte address 0x4 - core index']
  #allocation1 [shape = 'u32[72,128]{1,0:T(1,128)}', space=vmem, size = 0x9000, scoped, tag = 'internal scratch']
  #allocation2 [shape = 'f32[8,8,128]{2,1,0:T(8,128)}', space=vmem, size = 0x8000, scoped, tag = 'scratch operand']
  #allocation3 [shape = 'f32[8,8,384]{2,1,0:T(8,128)}', space=vmem, size = 0x18000, scoped, tag = 'scratch operand']
  #allocation4 [shape = 's32[1]{0}', space=sflag, size = 0x4, scoped, tag = 'scratch operand']
  #allocation11 [shape = 's32[]', space=sflag, size = 0x4, offset = 0, fixed_abs, tag = 'sflag constant byte address 0x0 - dummy sync flag']
  #allocation12 [shape = 's32[]', space=sflag, size = 0x4, offset = 0, fixed_abs, tag = 'sflag constant byte address 0x0 - dummy sync flag']
  #allocation13 [shape = 'u32[]', space=smem, size = 0x4, offset = 0x44, fixed_abs, tag = 'smem constant byte address 0x44 - assertion arg 0']
  #allocation14 [shape = 'u32[]', space=smem, size = 0x4, offset = 0x48, fixed_abs, tag = 'smem constant byte address 0x48 - assertion arg 1']
  %s0 = inlined_call_operand.hbm [shape: f32[8,8,128], index: 0, kind: input, shape index: {}]
  %s1 = inlined_call_operand.vmem [shape: s32[8,1], index: 1, kind: input, shape index: {}]
  %s2 = inlined_call_operand.hbm [shape: f32[2,256,384], index: 2, kind: input, shape index: {}]
  %s3 = inlined_call_operand.vmem [shape: f32[2,1,384], index: 3, kind: input, shape index: {}]
  %s4 = inlined_call_operand.vmem [shape: f32[2,1,384], index: 4, kind: input, shape index: {}]
  %s5 = inlined_call_operand.hbm [shape: f32[8,8,128], index: 5, kind: output, shape index: {0}]
  %s6 = inlined_call_operand.hbm [shape: f32[2,8,128], index: 6, kind: output, shape index: {1}]
  %7 = xla_tuple %s5, %s6
  %s8 = sld [smem:[#allocation0]]
  $region73: #{tpu_custom_call.1} parent=0
    _
  %s10 = ssub.s32 1, %s8
  %s11 = scalar_select 0, %s10, %s8
  $region1: #{tpu_custom_call.1} parent=0
    #allocation5 [shape = 'u8[786432]{0}', space=vmem, size = 0xc0000, scoped, tag = 'input window, operand 2']
    #allocation6 [shape = 's32[2]{0}', space=sflag, size = 0x8, scoped, tag = 'scoped memory for tpu_custom_call.1']
    #allocation7 [shape = 's32[2]{0}', space=sflag, size = 0x8, scoped, tag = 'scoped memory for tpu_custom_call.1']
    #allocation8 [shape = 'u8[32768]{0}', space=vmem, size = 0x8000, scoped, tag = 'output window, operand 0, single buffered']
    #allocation9 [shape = 'u8[8192]{0}', space=vmem, size = 0x2000, scoped, tag = 'output window, operand 1']
    #allocation10 [shape = 's32[2]{0}', space=sflag, size = 0x8, scoped, tag = 'scoped memory for tpu_custom_call.1']
    %12 = vsyncpa [#allocation6], 0
    %s13 = scalar_lea.sflag [#allocation6], 1
    %14 = vsyncpa %s13, 0
    %15 = vsyncpa [#allocation7], 0
    %16 = vsyncpa [#allocation10], 0
    %s17 = scalar_lea.sflag [#allocation10], 1
    %18 = vsyncpa %s17, 0
    loop: start=0, step=1, limit=4
    $region2: #{tpu_custom_call.1} parent=1 // loop_pre_header
      _
    $region3: #{tpu_custom_call.1} parent=1 // loop_header
      %s20 = sphi 0, %s24
      %p21 = scmp.ge.s32.totalorder %s20, 4
      %s28 = sphi 0, %s28
      %s30 = sphi 0, %s28
      %s31 = sphi 0, %s30
      %s45 = sphi 0, %s31
      %s51 = sphi 0, %s53
      %s54 = sphi 0, %s51
      %s55 = sphi 0, %s54
      %s71 = sphi 0, %s55
      %s77 = sphi 0, %s79
      %s80 = sphi 0, %s77
      %s81 = sphi 0, %s80
      %s97 = sphi 0, %s81
      %s103 = sphi 0, %s105
      %s106 = sphi 0, %s103
      %s107 = sphi 0, %s106
      %s123 = sphi 0, %s107
      %s127 = sphi 0, %s127
      %s129 = sphi 0, %s127
      %s130 = sphi 0, %s129
      %s144 = sphi 0, %s130
      %s150 = sphi 0, %s152
      %s153 = sphi 0, %s150
      %s154 = sphi 0, %s153
      %s170 = sphi 0, %s154
    $region4: #{tpu_custom_call.1} parent=1 // loop_header_branch
      %23 = sbr.rel (%p21) target = $region8
    $region5: #{tpu_custom_call.1} parent=1 // loop_body
      %s25 = ssub.s32 %s20, 1
      %s26 = ssub.s32 %s20, 2
      %s27 = sadd.s32 %s20, 1
      %s29 = sadd.s32 %s28, 1
      %p32 = scmp.eq.s32.totalorder %s20, 1
      %p33 = scmp.ne.s32.totalorder %s28, %s30
      %p34 = scmp.eq.s32.totalorder %s20, 0
      %p35 = por %p33, %p34
      %p36 = scmp.ne.s32.totalorder %s28, %s30
      %p37 = scmp.eq.s32.totalorder %s25, 1
      %p38 = por %p36, %p37
      %p39 = scmp.ne.s32.totalorder %s30, %s31
      %p40 = scmp.eq.s32.totalorder %s25, 0
      %p41 = por %p39, %p40
      %p42 = scmp.ne.s32.totalorder %s30, %s31
      %p43 = scmp.eq.s32.totalorder %s26, 1
      %p44 = por %p42, %p43
      %p46 = scmp.ne.s32.totalorder %s31, %s45
      %p47 = scmp.eq.s32.totalorder %s26, 0
      %p48 = por %p46, %p47
      %s49 = ssub.s32 %s20, %s27
      %p50 = scmp.eq.s32.totalorder %s49, 0
      %s52 = sadd.s32 %s51, 1
      %s53 = scalar_select %p50, %s51, %s52
      %p56 = pneg %p50
      %p57 = scmp.eq.s32.totalorder %s20, 1
      %p58 = por %p56, %p57
      %p59 = scmp.ne.s32.totalorder %s51, %s54
      %p60 = scmp.eq.s32.totalorder %s20, 0
      %p61 = por %p59, %p60
      %p62 = scmp.ne.s32.totalorder %s51, %s54
      %p63 = scmp.eq.s32.totalorder %s25, 1
      %p64 = por %p62, %p63
      %p65 = scmp.ne.s32.totalorder %s54, %s55
      %p66 = scmp.eq.s32.totalorder %s25, 0
      %p67 = por %p65, %p66
      %p68 = scmp.ne.s32.totalorder %s54, %s55
      %p69 = scmp.eq.s32.totalorder %s26, 1
      %p70 = por %p68, %p69
      %p72 = scmp.ne.s32.totalorder %s55, %s71
      %p73 = scmp.eq.s32.totalorder %s26, 0
      %p74 = por %p72, %p73
      %s75 = ssub.s32 %s20, %s27
      %p76 = scmp.eq.s32.totalorder %s75, 0
      %s78 = sadd.s32 %s77, 1
      %s79 = scalar_select %p76, %s77, %s78
      %p82 = pneg %p76
      %p83 = scmp.eq.s32.totalorder %s20, 1
      %p84 = por %p82, %p83
      %p85 = scmp.ne.s32.totalorder %s77, %s80
      %p86 = scmp.eq.s32.totalorder %s20, 0
      %p87 = por %p85, %p86
      %p88 = scmp.ne.s32.totalorder %s77, %s80
      %p89 = scmp.eq.s32.totalorder %s25, 1
      %p90 = por %p88, %p89
      %p91 = scmp.ne.s32.totalorder %s80, %s81
      %p92 = scmp.eq.s32.totalorder %s25, 0
      %p93 = por %p91, %p92
      %p94 = scmp.ne.s32.totalorder %s80, %s81
      %p95 = scmp.eq.s32.totalorder %s26, 1
      %p96 = por %p94, %p95
      %p98 = scmp.ne.s32.totalorder %s81, %s97
      %p99 = scmp.eq.s32.totalorder %s26, 0
      %p100 = por %p98, %p99
      %s101 = ssub.s32 %s20, %s27
      %p102 = scmp.eq.s32.totalorder %s101, 0
      %s104 = sadd.s32 %s103, 1
      %s105 = scalar_select %p102, %s103, %s104
      %p108 = pneg %p102
      %p109 = scmp.eq.s32.totalorder %s20, 1
      %p110 = por %p108, %p109
      %p111 = scmp.ne.s32.totalorder %s103, %s106
      %p112 = scmp.eq.s32.totalorder %s20, 0
      %p113 = por %p111, %p112
      %p114 = scmp.ne.s32.totalorder %s103, %s106
      %p115 = scmp.eq.s32.totalorder %s25, 1
      %p116 = por %p114, %p115
      %p117 = scmp.ne.s32.totalorder %s106, %s107
      %p118 = scmp.eq.s32.totalorder %s25, 0
      %p119 = por %p117, %p118
      %p120 = scmp.ne.s32.totalorder %s106, %s107
      %p121 = scmp.eq.s32.totalorder %s26, 1
      %p122 = por %p120, %p121
      %p124 = scmp.ne.s32.totalorder %s107, %s123
      %p125 = scmp.eq.s32.totalorder %s26, 0
      %p126 = por %p124, %p125
      %s128 = sadd.s32 %s127, 1
      %p131 = scmp.eq.s32.totalorder %s20, 1
      %p132 = scmp.ne.s32.totalorder %s127, %s129
      %p133 = scmp.eq.s32.totalorder %s20, 0
      %p134 = por %p132, %p133
      %p135 = scmp.ne.s32.totalorder %s127, %s129
      %p136 = scmp.eq.s32.totalorder %s25, 1
      %p137 = por %p135, %p136
      %p138 = scmp.ne.s32.totalorder %s129, %s130
      %p139 = scmp.eq.s32.totalorder %s25, 0
      %p140 = por %p138, %p139
      %p141 = scmp.ne.s32.totalorder %s129, %s130
      %p142 = scmp.eq.s32.totalorder %s26, 1
      %p143 = por %p141, %p142
      %p145 = scmp.ne.s32.totalorder %s130, %s144
      %p146 = scmp.eq.s32.totalorder %s26, 0
      %p147 = por %p145, %p146
      %s148 = ssub.s32 %s20, %s27
      %p149 = scmp.eq.s32.totalorder %s148, 0
      %s151 = sadd.s32 %s150, 1
      %s152 = scalar_select %p149, %s150, %s151
      %p155 = pneg %p149
      %p156 = scmp.eq.s32.totalorder %s20, 1
      %p157 = por %p155, %p156
      %p158 = scmp.ne.s32.totalorder %s150, %s153
      %p159 = scmp.eq.s32.totalorder %s20, 0
      %p160 = por %p158, %p159
      %p161 = scmp.ne.s32.totalorder %s150, %s153
      %p162 = scmp.eq.s32.totalorder %s25, 1
      %p163 = por %p161, %p162
      %p164 = scmp.ne.s32.totalorder %s153, %s154
      %p165 = scmp.eq.s32.totalorder %s25, 0
      %p166 = por %p164, %p165
      %p167 = scmp.ne.s32.totalorder %s153, %s154
      %p168 = scmp.eq.s32.totalorder %s26, 1
      %p169 = por %p167, %p168
      %p171 = scmp.ne.s32.totalorder %s154, %s170
      %p172 = scmp.eq.s32.totalorder %s26, 0
      %p173 = por %p171, %p172
      %p174 = scmp.le.s32.totalorder 1, %s20
      %p175 = scmp.lt.s32.totalorder %s20, 3
      %p176 = pnand %p174, %p175
      %p177 = pneg %p176
      // Predicated region
      $region9: #{tpu_custom_call.1} parent=5 // pred_check
        _
      $region10: #{tpu_custom_call.1} parent=5 // pred_check_branch
        %179 = sbr.rel (%p176) target = $region12
      $region11: #{tpu_custom_call.1} parent=5 // pred_region
        %s180 = ssub.s32 %s20, 1
        // Predicated region
        $region13: #{tpu_custom_call.1} parent=11 // pred_check
          %p181 = pneg %p41
        $region14: #{tpu_custom_call.1} parent=11 // pred_check_branch
          %183 = sbr.rel (%p181) target = $region16
        $region15: #{tpu_custom_call.1} parent=11 // pred_region
          _
        $region16: #{tpu_custom_call.1} parent=11 // pred_fallthru
          _
      $region12: #{tpu_custom_call.1} parent=5 // pred_fallthru
        _
      %p184 = scmp.lt.s32.totalorder %s20, 2
      // Predicated region
      $region17: #{tpu_custom_call.1} parent=5 // pred_check
        %p185 = pneg %p184
      $region18: #{tpu_custom_call.1} parent=5 // pred_check_branch
        %187 = sbr.rel (%p185) target = $region20
      $region19: #{tpu_custom_call.1} parent=5 // pred_region
        // Predicated region
        $region21: #{tpu_custom_call.1} parent=19 // pred_check
          %p188 = pneg %p61
        $region22: #{tpu_custom_call.1} parent=19 // pred_check_branch
          %190 = sbr.rel (%p188) target = $region24
        $region23: #{tpu_custom_call.1} parent=19 // pred_region
          %s191 = sand.u32 %s51, 1
          %s192 = scalar_lea.sflag [#allocation6], %s191
          %s193 = sand.u32 %s51, 1
          %s194 = smul.addr %s193, 768
          %s195 = scalar_lea.vmem [#allocation5], %s194
          %197 = vsyncadd %s192, 0
          %s198 = smul.addr %s20, 96
          %s199 = smul.addr %s198, 8
          %s200 = scalar_lea.hbm %s2, %s199
          %s201 = sshll.u32 %s200, 4
          %s202 = int_to_ptr.hbm [resolvable:$true] %s201
          %s203 = sshll.u32 %s195, 4
          %s204 = int_to_ptr.vmem [resolvable:$true] %s203
          %209 = dma.hbm_to_vmem [thread:$0]  %s202, 12288, %s204, %s192, 384, 384, 24
        $region24: #{tpu_custom_call.1} parent=19 // pred_fallthru
          _
        // Predicated region
        $region25: #{tpu_custom_call.1} parent=19 // pred_check
          %p210 = pneg %p87
        $region26: #{tpu_custom_call.1} parent=19 // pred_check_branch
          %212 = sbr.rel (%p210) target = $region28
        $region27: #{tpu_custom_call.1} parent=19 // pred_region
          %p213 = scmp.lt.s32.totalorder %s20, 1
          %s214 = scalar_select %p213, %s20, 1
          %s215 = smul.addr %s214, 3
          %s216 = scalar_lea.vmem %s3, %s215
        $region28: #{tpu_custom_call.1} parent=19 // pred_fallthru
          _
        // Predicated region
        $region29: #{tpu_custom_call.1} parent=19 // pred_check
          %p217 = pneg %p113
        $region30: #{tpu_custom_call.1} parent=19 // pred_check_branch
          %219 = sbr.rel (%p217) target = $region32
        $region31: #{tpu_custom_call.1} parent=19 // pred_region
          %p220 = scmp.lt.s32.totalorder %s20, 1
          %s221 = scalar_select %p220, %s20, 1
          %s222 = smul.addr %s221, 3
          %s223 = scalar_lea.vmem %s4, %s222
        $region32: #{tpu_custom_call.1} parent=19 // pred_fallthru
          _
      $region20: #{tpu_custom_call.1} parent=5 // pred_fallthru
        _
      %p224 = scmp.le.s32.totalorder 1, %s20
      %p225 = scmp.lt.s32.totalorder %s20, 3
      %p226 = pnand %p224, %p225
      %p227 = pneg %p226
      // Predicated region
      $region33: #{tpu_custom_call.1} parent=5 // pred_check
        _
      $region34: #{tpu_custom_call.1} parent=5 // pred_check_branch
        %229 = sbr.rel (%p226) target = $region36
      $region35: #{tpu_custom_call.1} parent=5 // pred_region
        %s230 = ssub.s32 %s20, 1
        %s231 = sand.u32 %s54, 1
        %s232 = scalar_lea.sflag [#allocation6], %s231
        %s233 = sand.u32 %s54, 1
        %s234 = smul.addr %s233, 768
        %s235 = scalar_lea.vmem [#allocation5], %s234
        // Predicated region
        $region37: #{tpu_custom_call.1} parent=35 // pred_check
          %p236 = pneg %p67
        $region38: #{tpu_custom_call.1} parent=35 // pred_check_branch
          %238 = sbr.rel (%p236) target = $region40
        $region39: #{tpu_custom_call.1} parent=35 // pred_region
          %240 = dma.done %s232, 12288
        $region40: #{tpu_custom_call.1} parent=35 // pred_fallthru
          _
        %p241 = pneg %p41
        %p242 = pneg %p38
        %s243 = sand.u32 %s54, 1
        %s244 = scalar_lea.sflag [#allocation6], %s243
        %s245 = sand.u32 %s54, 1
        %s246 = smul.addr %s245, 768
        %s247 = scalar_lea.vmem [#allocation5], %s246
        %p248 = pneg %p67
        %p249 = pneg %p64
        %p250 = scmp.lt.s32.totalorder %s25, 1
        %s251 = scalar_select %p250, %s25, 1
        %s252 = smul.addr %s251, 3
        %s253 = scalar_lea.vmem %s3, %s252
        %p254 = pneg %p93
        %p255 = pneg %p90
        %p256 = scmp.lt.s32.totalorder %s25, 1
        %s257 = scalar_select %p256, %s25, 1
        %s258 = smul.addr %s257, 3
        %s259 = scalar_lea.vmem %s4, %s258
        %p260 = pneg %p119
        %p261 = pneg %p116
        %p262 = pneg %p140
        %p263 = pneg %p137
        %p264 = pneg %p166
        %p265 = pneg %p163
        %s266 = sand.u32 %s153, 1
        %s267 = scalar_lea.sflag [#allocation10], %s266
        %s268 = sand.u32 %s153, 1
        %s269 = smul.addr %s268, 8
        %s270 = scalar_lea.vmem [#allocation9], %s269
        %p271 = scmp.lt.s32.totalorder %s25, 1
        %s272 = scalar_select %p271, %s25, 1
        %s273 = smul.addr %s272, 3
        %s274 = scalar_lea.vmem %s3, %s273
        %p275 = scmp.lt.s32.totalorder %s25, 1
        %s276 = scalar_select %p275, %s25, 1
        %s277 = smul.addr %s276, 3
        %s278 = scalar_lea.vmem %s4, %s277
        %p279 = scmp.eq.s32.totalorder %s25, 0
        // Predicated region
        $region41: #{tpu_custom_call.1} parent=35 // pred_check
          %p280 = pneg %p279
        $region42: #{tpu_custom_call.1} parent=35 // pred_check_branch
          %282 = sbr.rel (%p280) target = $region44
        $region43: #{tpu_custom_call.1} parent=35 // pred_region
          // Predicated region
          $region45: #{tpu_custom_call.1} parent=43 // pred_check
            _
          $region46: #{tpu_custom_call.1} parent=43 // pred_check_branch
            %284 = sbr.rel target = $region48
          $region47: #{tpu_custom_call.1} parent=43 // pred_region
            %285 = sst [smem:[#allocation13]] [#allocation12]
            %286 = sst [smem:[#allocation14]] [#allocation11]
          $region48: #{tpu_custom_call.1} parent=43 // pred_fallthru
            _
          %288 = shalt.err (0)
          %s290 = sshll.u32 %s0, 4
          %s291 = int_to_ptr.hbm [resolvable:$true] %s290
          %s292 = sshll.u32 [#allocation2], 4
          %s293 = int_to_ptr.vmem [resolvable:$true] %s292
          %295 = dma.hbm_to_vmem [thread:$0]  %s291, 1024, %s293, [#allocation4]
          %s296 = smul.u32 8, 8
          %s297 = smul.u32 %s296, 1
          %s298 = sshll.u32 %s297, 4
          %299 = dma.done [#allocation4], %s298
        $region44: #{tpu_custom_call.1} parent=35 // pred_fallthru
          _
        %v300 = vld [vmem:[%s1] sm:$0xff]
        %v301 = vld [vmem:[%s274] sm:$0x7]
        %v302 = vld [vmem:[%s278] sm:$0x7]
        %v303 = vld [vmem:[%s235] sm:$0xff]
        %v304 = vld [vmem:[%s235 + $0x8] sm:$0xff]
        %v305 = vld [vmem:[%s235 + $0x10] sm:$0xff]
        %v306 = vld [vmem:[%s235 + $0x18] sm:$0xff]
        %v307 = vld [vmem:[%s235 + $0x20] sm:$0xff]
        %v308 = vld [vmem:[%s235 + $0x28] sm:$0xff]
        %v309 = vld [vmem:[%s235 + $0x30] sm:$0xff]
        %v310 = vld [vmem:[%s235 + $0x38] sm:$0xff]
        %v311 = vld [vmem:[%s235 + $0x40] sm:$0xff]
        %v312 = vld [vmem:[%s235 + $0x48] sm:$0xff]
        %v313 = vld [vmem:[%s235 + $0x50] sm:$0xff]
        %v314 = vld [vmem:[%s235 + $0x58] sm:$0xff]
        %v315 = vld [vmem:[%s235 + $0x60] sm:$0xff]
        %v316 = vld [vmem:[%s235 + $0x68] sm:$0xff]
        %v317 = vld [vmem:[%s235 + $0x70] sm:$0xff]
        %v318 = vld [vmem:[%s235 + $0x78] sm:$0xff]
        %v319 = vld [vmem:[%s235 + $0x80] sm:$0xff]
        %v320 = vld [vmem:[%s235 + $0x88] sm:$0xff]
        %v321 = vld [vmem:[%s235 + $0x90] sm:$0xff]
        %v322 = vld [vmem:[%s235 + $0x98] sm:$0xff]
        %v323 = vld [vmem:[%s235 + $0xa0] sm:$0xff]
        %v324 = vld [vmem:[%s235 + $0xa8] sm:$0xff]
        %v325 = vld [vmem:[%s235 + $0xb0] sm:$0xff]
        %v326 = vld [vmem:[%s235 + $0xb8] sm:$0xff]
        %v327 = vld [vmem:[%s235 + $0xc0] sm:$0xff]
        %v328 = vld [vmem:[%s235 + $0xc8] sm:$0xff]
        %v329 = vld [vmem:[%s235 + $0xd0] sm:$0xff]
        %v330 = vld [vmem:[%s235 + $0xd8] sm:$0xff]
        %v331 = vld [vmem:[%s235 + $0xe0] sm:$0xff]
        %v332 = vld [vmem:[%s235 + $0xe8] sm:$0xff]
        %v333 = vld [vmem:[%s235 + $0xf0] sm:$0xff]
        %v334 = vld [vmem:[%s235 + $0xf8] sm:$0xff]
        %v335 = vld [vmem:[%s235 + $0x100] sm:$0xff]
        %v336 = vld [vmem:[%s235 + $0x108] sm:$0xff]
        %v337 = vld [vmem:[%s235 + $0x110] sm:$0xff]
        %v338 = vld [vmem:[%s235 + $0x118] sm:$0xff]
        %v339 = vld [vmem:[%s235 + $0x120] sm:$0xff]
        %v340 = vld [vmem:[%s235 + $0x128] sm:$0xff]
        %v341 = vld [vmem:[%s235 + $0x130] sm:$0xff]
        %v342 = vld [vmem:[%s235 + $0x138] sm:$0xff]
        %v343 = vld [vmem:[%s235 + $0x140] sm:$0xff]
        %v344 = vld [vmem:[%s235 + $0x148] sm:$0xff]
        %v345 = vld [vmem:[%s235 + $0x150] sm:$0xff]
        %v346 = vld [vmem:[%s235 + $0x158] sm:$0xff]
        %v347 = vld [vmem:[%s235 + $0x160] sm:$0xff]
        %v348 = vld [vmem:[%s235 + $0x168] sm:$0xff]
        %v349 = vld [vmem:[%s235 + $0x170] sm:$0xff]
        %v350 = vld [vmem:[%s235 + $0x178] sm:$0xff]
        %v351 = vld [vmem:[#allocation2] sm:$0xff]
        %v352 = vld [vmem:[#allocation2 + $0x8] sm:$0xff]
        %v353 = vld [vmem:[#allocation2 + $0x10] sm:$0xff]
        %v354 = vld [vmem:[#allocation2 + $0x18] sm:$0xff]
        %v355 = vld [vmem:[#allocation2 + $0x20] sm:$0xff]
        %v356 = vld [vmem:[#allocation2 + $0x28] sm:$0xff]
        %v357 = vld [vmem:[#allocation2 + $0x30] sm:$0xff]
        %v358 = vld [vmem:[#allocation2 + $0x38] sm:$0xff]
        %v360 = vperm.slane %v301, 0
        %v361 = vperm.slane %v301, 1
        %v362 = vperm.slane %v301, 2
        %366 = vmatpush.msra.mxu0 %v348
        %367 = vmatpush.msra.mxu0 %v345
        %368 = vmatpush.msra.mxu0 %v342
        %369 = vmatpush.msra.mxu0 %v339
        %370 = vmatpush.msra.mxu0 %v336
        %371 = vmatpush.msra.mxu0 %v333
        %372 = vmatpush.msra.mxu0 %v330
        %373 = vmatpush.msra.mxu0 %v327
        %374 = vmatpush.msra.mxu0 %v324
        %375 = vmatpush.msra.mxu0 %v321
        %376 = vmatpush.msra.mxu0 %v318
        %377 = vmatpush.msra.mxu0 %v315
        %378 = vmatpush.msra.mxu0 %v312
        %379 = vmatpush.msra.mxu0 %v309
        %380 = vmatpush.msra.mxu0 %v306
        %381 = vmatpush.msra.mxu0 %v303
        %382 = vmatmul.f32.gmra.mxu0 %v351
        %v383 = vpop.f32.mrf.mxu0
        %v384 = vadd.f32 %v360, %v383
        %385 = vmatmul.f32.gmra.mxu0 %v352
        %v386 = vpop.f32.mrf.mxu0
        %v387 = vadd.f32 %v360, %v386
        %388 = vmatmul.f32.gmra.mxu0 %v353
        %v389 = vpop.f32.mrf.mxu0
        %v390 = vadd.f32 %v360, %v389
        %391 = vmatmul.f32.gmra.mxu0 %v354
        %v392 = vpop.f32.mrf.mxu0
        %v393 = vadd.f32 %v360, %v392
        %394 = vmatmul.f32.gmra.mxu0 %v355
        %v395 = vpop.f32.mrf.mxu0
        %v396 = vadd.f32 %v360, %v395
        %397 = vmatmul.f32.gmra.mxu0 %v356
        %v398 = vpop.f32.mrf.mxu0
        %v399 = vadd.f32 %v360, %v398
        %400 = vmatmul.f32.gmra.mxu0 %v357
        %v401 = vpop.f32.mrf.mxu0
        %v402 = vadd.f32 %v360, %v401
        %403 = vmatmul.f32.gmra.mxu0 %v358
        %v404 = vpop.f32.mrf.mxu0
        %v405 = vadd.f32 %v360, %v404
        %406 = vdwg.mxu0
        %407 = vmatpush.msra.mxu0 %v349
        %408 = vmatpush.msra.mxu0 %v346
        %409 = vmatpush.msra.mxu0 %v343
        %410 = vmatpush.msra.mxu0 %v340
        %411 = vmatpush.msra.mxu0 %v337
        %412 = vmatpush.msra.mxu0 %v334
        %413 = vmatpush.msra.mxu0 %v331
        %414 = vmatpush.msra.mxu0 %v328
        %415 = vmatpush.msra.mxu0 %v325
        %416 = vmatpush.msra.mxu0 %v322
        %417 = vmatpush.msra.mxu0 %v319
        %418 = vmatpush.msra.mxu0 %v316
        %419 = vmatpush.msra.mxu0 %v313
        %420 = vmatpush.msra.mxu0 %v310
        %421 = vmatpush.msra.mxu0 %v307
        %422 = vmatpush.msra.mxu0 %v304
        %423 = vmatmul.f32.gmra.mxu0 %v351
        %v424 = vpop.f32.mrf.mxu0
        %v425 = vadd.f32 %v361, %v424
        %426 = vmatmul.f32.gmra.mxu0 %v352
        %v427 = vpop.f32.mrf.mxu0
        %v428 = vadd.f32 %v361, %v427
        %429 = vmatmul.f32.gmra.mxu0 %v353
        %v430 = vpop.f32.mrf.mxu0
        %v431 = vadd.f32 %v361, %v430
        %432 = vmatmul.f32.gmra.mxu0 %v354
        %v433 = vpop.f32.mrf.mxu0
        %v434 = vadd.f32 %v361, %v433
        %435 = vmatmul.f32.gmra.mxu0 %v355
        %v436 = vpop.f32.mrf.mxu0
        %v437 = vadd.f32 %v361, %v436
        %438 = vmatmul.f32.gmra.mxu0 %v356
        %v439 = vpop.f32.mrf.mxu0
        %v440 = vadd.f32 %v361, %v439
        %441 = vmatmul.f32.gmra.mxu0 %v357
        %v442 = vpop.f32.mrf.mxu0
        %v443 = vadd.f32 %v361, %v442
        %444 = vmatmul.f32.gmra.mxu0 %v358
        %v445 = vpop.f32.mrf.mxu0
        %v446 = vadd.f32 %v361, %v445
        %447 = vdwg.mxu0
        %448 = vmatpush.msra.mxu0 %v350
        %449 = vmatpush.msra.mxu0 %v347
        %450 = vmatpush.msra.mxu0 %v344
        %451 = vmatpush.msra.mxu0 %v341
        %452 = vmatpush.msra.mxu0 %v338
        %453 = vmatpush.msra.mxu0 %v335
        %454 = vmatpush.msra.mxu0 %v332
        %455 = vmatpush.msra.mxu0 %v329
        %456 = vmatpush.msra.mxu0 %v326
        %457 = vmatpush.msra.mxu0 %v323
        %458 = vmatpush.msra.mxu0 %v320
        %459 = vmatpush.msra.mxu0 %v317
        %460 = vmatpush.msra.mxu0 %v314
        %461 = vmatpush.msra.mxu0 %v311
        %462 = vmatpush.msra.mxu0 %v308
        %463 = vmatpush.msra.mxu0 %v305
        %464 = vmatmul.f32.gmra.mxu0 %v351
        %v465 = vpop.f32.mrf.mxu0
        %v466 = vadd.f32 %v362, %v465
        %467 = vmatmul.f32.gmra.mxu0 %v352
        %v468 = vpop.f32.mrf.mxu0
        %v469 = vadd.f32 %v362, %v468
        %470 = vmatmul.f32.gmra.mxu0 %v353
        %v471 = vpop.f32.mrf.mxu0
        %v472 = vadd.f32 %v362, %v471
        %473 = vmatmul.f32.gmra.mxu0 %v354
        %v474 = vpop.f32.mrf.mxu0
        %v475 = vadd.f32 %v362, %v474
        %476 = vmatmul.f32.gmra.mxu0 %v355
        %v477 = vpop.f32.mrf.mxu0
        %v478 = vadd.f32 %v362, %v477
        %479 = vmatmul.f32.gmra.mxu0 %v356
        %v480 = vpop.f32.mrf.mxu0
        %v481 = vadd.f32 %v362, %v480
        %482 = vmatmul.f32.gmra.mxu0 %v357
        %v483 = vpop.f32.mrf.mxu0
        %v484 = vadd.f32 %v362, %v483
        %485 = vmatmul.f32.gmra.mxu0 %v358
        %v486 = vpop.f32.mrf.mxu0
        %v487 = vadd.f32 %v362, %v486
        %488 = vdwg.mxu0
        %489 = vst [vmem:[#allocation3] sm:$0xff] %v384
        %490 = vst [vmem:[#allocation3 + $0x8] sm:$0xff] %v425
        %491 = vst [vmem:[#allocation3 + $0x10] sm:$0xff] %v466
        %492 = vst [vmem:[#allocation3 + $0x18] sm:$0xff] %v387
        %493 = vst [vmem:[#allocation3 + $0x20] sm:$0xff] %v428
        %494 = vst [vmem:[#allocation3 + $0x28] sm:$0xff] %v469
        %495 = vst [vmem:[#allocation3 + $0x30] sm:$0xff] %v390
        %496 = vst [vmem:[#allocation3 + $0x38] sm:$0xff] %v431
        %497 = vst [vmem:[#allocation3 + $0x40] sm:$0xff] %v472
        %498 = vst [vmem:[#allocation3 + $0x48] sm:$0xff] %v393
        %499 = vst [vmem:[#allocation3 + $0x50] sm:$0xff] %v434
        %500 = vst [vmem:[#allocation3 + $0x58] sm:$0xff] %v475
        %501 = vst [vmem:[#allocation3 + $0x60] sm:$0xff] %v396
        %502 = vst [vmem:[#allocation3 + $0x68] sm:$0xff] %v437
        %503 = vst [vmem:[#allocation3 + $0x70] sm:$0xff] %v478
        %504 = vst [vmem:[#allocation3 + $0x78] sm:$0xff] %v399
        %505 = vst [vmem:[#allocation3 + $0x80] sm:$0xff] %v440
        %506 = vst [vmem:[#allocation3 + $0x88] sm:$0xff] %v481
        %507 = vst [vmem:[#allocation3 + $0x90] sm:$0xff] %v402
        %508 = vst [vmem:[#allocation3 + $0x98] sm:$0xff] %v443
        %509 = vst [vmem:[#allocation3 + $0xa0] sm:$0xff] %v484
        %510 = vst [vmem:[#allocation3 + $0xa8] sm:$0xff] %v405
        %511 = vst [vmem:[#allocation3 + $0xb0] sm:$0xff] %v446
        %512 = vst [vmem:[#allocation3 + $0xb8] sm:$0xff] %v487
        %v513 = vld [vmem:[%s235 + $0x180] sm:$0xff]
        %v514 = vld [vmem:[%s235 + $0x188] sm:$0xff]
        %v515 = vld [vmem:[%s235 + $0x190] sm:$0xff]
        %v516 = vld [vmem:[%s235 + $0x198] sm:$0xff]
        %v517 = vld [vmem:[%s235 + $0x1a0] sm:$0xff]
        %v518 = vld [vmem:[%s235 + $0x1a8] sm:$0xff]
        %v519 = vld [vmem:[%s235 + $0x1b0] sm:$0xff]
        %v520 = vld [vmem:[%s235 + $0x1b8] sm:$0xff]
        %v521 = vld [vmem:[%s235 + $0x1c0] sm:$0xff]
        %v522 = vld [vmem:[%s235 + $0x1c8] sm:$0xff]
        %v523 = vld [vmem:[%s235 + $0x1d0] sm:$0xff]
        %v524 = vld [vmem:[%s235 + $0x1d8] sm:$0xff]
        %v525 = vld [vmem:[%s235 + $0x1e0] sm:$0xff]
        %v526 = vld [vmem:[%s235 + $0x1e8] sm:$0xff]
        %v527 = vld [vmem:[%s235 + $0x1f0] sm:$0xff]
        %v528 = vld [vmem:[%s235 + $0x1f8] sm:$0xff]
        %v529 = vld [vmem:[%s235 + $0x200] sm:$0xff]
        %v530 = vld [vmem:[%s235 + $0x208] sm:$0xff]
        %v531 = vld [vmem:[%s235 + $0x210] sm:$0xff]
        %v532 = vld [vmem:[%s235 + $0x218] sm:$0xff]
        %v533 = vld [vmem:[%s235 + $0x220] sm:$0xff]
        %v534 = vld [vmem:[%s235 + $0x228] sm:$0xff]
        %v535 = vld [vmem:[%s235 + $0x230] sm:$0xff]
        %v536 = vld [vmem:[%s235 + $0x238] sm:$0xff]
        %v537 = vld [vmem:[%s235 + $0x240] sm:$0xff]
        %v538 = vld [vmem:[%s235 + $0x248] sm:$0xff]
        %v539 = vld [vmem:[%s235 + $0x250] sm:$0xff]
        %v540 = vld [vmem:[%s235 + $0x258] sm:$0xff]
        %v541 = vld [vmem:[%s235 + $0x260] sm:$0xff]
        %v542 = vld [vmem:[%s235 + $0x268] sm:$0xff]
        %v543 = vld [vmem:[%s235 + $0x270] sm:$0xff]
        %v544 = vld [vmem:[%s235 + $0x278] sm:$0xff]
        %v545 = vld [vmem:[%s235 + $0x280] sm:$0xff]
        %v546 = vld [vmem:[%s235 + $0x288] sm:$0xff]
        %v547 = vld [vmem:[%s235 + $0x290] sm:$0xff]
        %v548 = vld [vmem:[%s235 + $0x298] sm:$0xff]
        %v549 = vld [vmem:[%s235 + $0x2a0] sm:$0xff]
        %v550 = vld [vmem:[%s235 + $0x2a8] sm:$0xff]
        %v551 = vld [vmem:[%s235 + $0x2b0] sm:$0xff]
        %v552 = vld [vmem:[%s235 + $0x2b8] sm:$0xff]
        %v553 = vld [vmem:[%s235 + $0x2c0] sm:$0xff]
        %v554 = vld [vmem:[%s235 + $0x2c8] sm:$0xff]
        %v555 = vld [vmem:[%s235 + $0x2d0] sm:$0xff]
        %v556 = vld [vmem:[%s235 + $0x2d8] sm:$0xff]
        %v557 = vld [vmem:[%s235 + $0x2e0] sm:$0xff]
        %v558 = vld [vmem:[%s235 + $0x2e8] sm:$0xff]
        %v559 = vld [vmem:[%s235 + $0x2f0] sm:$0xff]
        %v560 = vld [vmem:[%s235 + $0x2f8] sm:$0xff]
        %v561 = vld [vmem:[#allocation3] sm:$0xff]
        %v562 = vld [vmem:[#allocation3 + $0x8] sm:$0xff]
        %v563 = vld [vmem:[#allocation3 + $0x10] sm:$0xff]
        %v565 = vperm.slane %v302, 0
        %v566 = vperm.slane %v302, 1
        %v567 = vperm.slane %v302, 2
        %571 = vmatpush.msra.mxu0 %v558
        %572 = vmatpush.msra.mxu0 %v555
        %573 = vmatpush.msra.mxu0 %v552
        %574 = vmatpush.msra.mxu0 %v549
        %575 = vmatpush.msra.mxu0 %v546
        %576 = vmatpush.msra.mxu0 %v543
        %577 = vmatpush.msra.mxu0 %v540
        %578 = vmatpush.msra.mxu0 %v537
        %579 = vmatpush.msra.mxu0 %v534
        %580 = vmatpush.msra.mxu0 %v531
        %581 = vmatpush.msra.mxu0 %v528
        %582 = vmatpush.msra.mxu0 %v525
        %583 = vmatpush.msra.mxu0 %v522
        %584 = vmatpush.msra.mxu0 %v519
        %585 = vmatpush.msra.mxu0 %v516
        %586 = vmatpush.msra.mxu0 %v513
        %587 = vmatmul.f32.gmra.mxu0 0.0
        %v588 = vpop.f32.mrf.mxu0
        %v589 = vadd.f32 %v565, %v588
        %590 = vdwg.mxu0
        %591 = vmatpush.msra.mxu0 %v559
        %592 = vmatpush.msra.mxu0 %v556
        %593 = vmatpush.msra.mxu0 %v553
        %594 = vmatpush.msra.mxu0 %v550
        %595 = vmatpush.msra.mxu0 %v547
        %596 = vmatpush.msra.mxu0 %v544
        %597 = vmatpush.msra.mxu0 %v541
        %598 = vmatpush.msra.mxu0 %v538
        %599 = vmatpush.msra.mxu0 %v535
        %600 = vmatpush.msra.mxu0 %v532
        %601 = vmatpush.msra.mxu0 %v529
        %602 = vmatpush.msra.mxu0 %v526
        %603 = vmatpush.msra.mxu0 %v523
        %604 = vmatpush.msra.mxu0 %v520
        %605 = vmatpush.msra.mxu0 %v517
        %606 = vmatpush.msra.mxu0 %v514
        %607 = vmatmul.f32.gmra.mxu0 0.0
        %v608 = vpop.f32.mrf.mxu0
        %v609 = vadd.f32 %v566, %v608
        %610 = vdwg.mxu0
        %611 = vmatpush.msra.mxu0 %v560
        %612 = vmatpush.msra.mxu0 %v557
        %613 = vmatpush.msra.mxu0 %v554
        %614 = vmatpush.msra.mxu0 %v551
        %615 = vmatpush.msra.mxu0 %v548
        %616 = vmatpush.msra.mxu0 %v545
        %617 = vmatpush.msra.mxu0 %v542
        %618 = vmatpush.msra.mxu0 %v539
        %619 = vmatpush.msra.mxu0 %v536
        %620 = vmatpush.msra.mxu0 %v533
        %621 = vmatpush.msra.mxu0 %v530
        %622 = vmatpush.msra.mxu0 %v527
        %623 = vmatpush.msra.mxu0 %v524
        %624 = vmatpush.msra.mxu0 %v521
        %625 = vmatpush.msra.mxu0 %v518
        %626 = vmatpush.msra.mxu0 %v515
        %627 = vmatmul.f32.gmra.mxu0 0.0
        %v628 = vpop.f32.mrf.mxu0
        %v629 = vadd.f32 %v567, %v628
        %630 = vdwg.mxu0
        %v631 = vadd.f32 %v561, %v589
        %v632 = vmul.f32 %v631, 0.5
        %v633 = vtanh.pop %v632
        %v634 = vadd.f32 %v633, 1.0
        %v635 = vmul.f32 %v634, 0.5
        %v636 = vadd.f32 %v562, %v609
        %v637 = vmul.f32 %v636, 0.5
        %v638 = vtanh.pop %v637
        %v639 = vadd.f32 %v638, 1.0
        %v640 = vmul.f32 %v639, 0.5
        %v641 = vmul.f32 %v635, %v629
        %v642 = vadd.f32 %v563, %v641
        %v643 = vtanh.pop %v642
        %vm644 = vcmp.gt.s32.totalorder %v300, 0
        %v645 = vsel %vm644, 1, 0
        %v646 = vcvt.s32.f32 %v645
        %v647 = vsub.f32 1.0, %v640
        %649 = vset.pattern.permute.xlu0 0
        %650 = vperm.xlu0 %649, %v646
        %v651 = vpop.permute.xlu0 %650
        %v653 = vmul.f32 %v651, %v647
        %v654 = vmul.f32 %v653, %v643
        %v655 = vadd.f32 %v654, 0.0
        %656 = vst [vmem:[#allocation2] sm:$0xff] %v655
        %s657 = scalar_lea.vmem [#allocation3], 24
        %v658 = vld [vmem:[%s657] sm:$0xff]
        %v659 = vld [vmem:[%s657 + $0x8] sm:$0xff]
        %v660 = vld [vmem:[%s657 + $0x10] sm:$0xff]
        %661 = vmatpush.msra.mxu0 %v558
        %662 = vmatpush.msra.mxu0 %v555
        %663 = vmatpush.msra.mxu0 %v552
        %664 = vmatpush.msra.mxu0 %v549
        %665 = vmatpush.msra.mxu0 %v546
        %666 = vmatpush.msra.mxu0 %v543
        %667 = vmatpush.msra.mxu0 %v540
        %668 = vmatpush.msra.mxu0 %v537
        %669 = vmatpush.msra.mxu0 %v534
        %670 = vmatpush.msra.mxu0 %v531
        %671 = vmatpush.msra.mxu0 %v528
        %672 = vmatpush.msra.mxu0 %v525
        %673 = vmatpush.msra.mxu0 %v522
        %674 = vmatpush.msra.mxu0 %v519
        %675 = vmatpush.msra.mxu0 %v516
        %676 = vmatpush.msra.mxu0 %v513
        %677 = vmatmul.f32.gmra.mxu0 %v655
        %v678 = vpop.f32.mrf.mxu0
        %v679 = vadd.f32 %v565, %v678
        %680 = vdwg.mxu0
        %681 = vmatpush.msra.mxu0 %v559
        %682 = vmatpush.msra.mxu0 %v556
        %683 = vmatpush.msra.mxu0 %v553
        %684 = vmatpush.msra.mxu0 %v550
        %685 = vmatpush.msra.mxu0 %v547
        %686 = vmatpush.msra.mxu0 %v544
        %687 = vmatpush.msra.mxu0 %v541
        %688 = vmatpush.msra.mxu0 %v538
        %689 = vmatpush.msra.mxu0 %v535
        %690 = vmatpush.msra.mxu0 %v532
        %691 = vmatpush.msra.mxu0 %v529
        %692 = vmatpush.msra.mxu0 %v526
        %693 = vmatpush.msra.mxu0 %v523
        %694 = vmatpush.msra.mxu0 %v520
        %695 = vmatpush.msra.mxu0 %v517
        %696 = vmatpush.msra.mxu0 %v514
        %697 = vmatmul.f32.gmra.mxu0 %v655
        %v698 = vpop.f32.mrf.mxu0
        %v699 = vadd.f32 %v566, %v698
        %700 = vdwg.mxu0
        %701 = vmatpush.msra.mxu0 %v560
        %702 = vmatpush.msra.mxu0 %v557
        %703 = vmatpush.msra.mxu0 %v554
        %704 = vmatpush.msra.mxu0 %v551
        %705 = vmatpush.msra.mxu0 %v548
        %706 = vmatpush.msra.mxu0 %v545
        %707 = vmatpush.msra.mxu0 %v542
        %708 = vmatpush.msra.mxu0 %v539
        %709 = vmatpush.msra.mxu0 %v536
        %710 = vmatpush.msra.mxu0 %v533
        %711 = vmatpush.msra.mxu0 %v530
        %712 = vmatpush.msra.mxu0 %v527
        %713 = vmatpush.msra.mxu0 %v524
        %714 = vmatpush.msra.mxu0 %v521
        %715 = vmatpush.msra.mxu0 %v518
        %716 = vmatpush.msra.mxu0 %v515
        %717 = vmatmul.f32.gmra.mxu0 %v655
        %v718 = vpop.f32.mrf.mxu0
        %v719 = vadd.f32 %v567, %v718
        %720 = vdwg.mxu0
        %v721 = vadd.f32 %v658, %v679
        %v722 = vmul.f32 %v721, 0.5
        %v723 = vtanh.pop %v722
        %v724 = vadd.f32 %v723, 1.0
        %v725 = vmul.f32 %v724, 0.5
        %v726 = vadd.f32 %v659, %v699
        %v727 = vmul.f32 %v726, 0.5
        %v728 = vtanh.pop %v727
        %v729 = vadd.f32 %v728, 1.0
        %v730 = vmul.f32 %v729, 0.5
        %v731 = vmul.f32 %v725, %v719
        %v732 = vadd.f32 %v660, %v731
        %v733 = vtanh.pop %v732
        %vm734 = vcmp.gt.s32.totalorder %v300, 1
        %v735 = vsel %vm734, 1, 0
        %v736 = vcvt.s32.f32 %v735
        %v737 = vsub.f32 1.0, %v730
        %739 = vset.pattern.permute.xlu0 0
        %740 = vperm.xlu0 %739, %v736
        %v741 = vpop.permute.xlu0 %740
        %v743 = vmul.f32 %v741, %v737
        %v744 = vsub.f32 %v733, %v655
        %v745 = vmul.f32 %v743, %v744
        %v746 = vadd.f32 %v655, %v745
        %s747 = scalar_lea.vmem [#allocation2], 8
        %748 = vst [vmem:[%s747] sm:$0xff] %v746
        %s749 = scalar_lea.vmem [#allocation3], 48
        %v750 = vld [vmem:[%s749] sm:$0xff]
        %v751 = vld [vmem:[%s749 + $0x8] sm:$0xff]
        %v752 = vld [vmem:[%s749 + $0x10] sm:$0xff]
        %753 = vmatpush.msra.mxu0 %v558
        %754 = vmatpush.msra.mxu0 %v555
        %755 = vmatpush.msra.mxu0 %v552
        %756 = vmatpush.msra.mxu0 %v549
        %757 = vmatpush.msra.mxu0 %v546
        %758 = vmatpush.msra.mxu0 %v543
        %759 = vmatpush.msra.mxu0 %v540
        %760 = vmatpush.msra.mxu0 %v537
        %761 = vmatpush.msra.mxu0 %v534
        %762 = vmatpush.msra.mxu0 %v531
        %763 = vmatpush.msra.mxu0 %v528
        %764 = vmatpush.msra.mxu0 %v525
        %765 = vmatpush.msra.mxu0 %v522
        %766 = vmatpush.msra.mxu0 %v519
        %767 = vmatpush.msra.mxu0 %v516
        %768 = vmatpush.msra.mxu0 %v513
        %769 = vmatmul.f32.gmra.mxu0 %v746
        %v770 = vpop.f32.mrf.mxu0
        %v771 = vadd.f32 %v565, %v770
        %772 = vdwg.mxu0
        %773 = vmatpush.msra.mxu0 %v559
        %774 = vmatpush.msra.mxu0 %v556
        %775 = vmatpush.msra.mxu0 %v553
        %776 = vmatpush.msra.mxu0 %v550
        %777 = vmatpush.msra.mxu0 %v547
        %778 = vmatpush.msra.mxu0 %v544
        %779 = vmatpush.msra.mxu0 %v541
        %780 = vmatpush.msra.mxu0 %v538
        %781 = vmatpush.msra.mxu0 %v535
        %782 = vmatpush.msra.mxu0 %v532
        %783 = vmatpush.msra.mxu0 %v529
        %784 = vmatpush.msra.mxu0 %v526
        %785 = vmatpush.msra.mxu0 %v523
        %786 = vmatpush.msra.mxu0 %v520
        %787 = vmatpush.msra.mxu0 %v517
        %788 = vmatpush.msra.mxu0 %v514
        %789 = vmatmul.f32.gmra.mxu0 %v746
        %v790 = vpop.f32.mrf.mxu0
        %v791 = vadd.f32 %v566, %v790
        %792 = vdwg.mxu0
        %793 = vmatpush.msra.mxu0 %v560
        %794 = vmatpush.msra.mxu0 %v557
        %795 = vmatpush.msra.mxu0 %v554
        %796 = vmatpush.msra.mxu0 %v551
        %797 = vmatpush.msra.mxu0 %v548
        %798 = vmatpush.msra.mxu0 %v545
        %799 = vmatpush.msra.mxu0 %v542
        %800 = vmatpush.msra.mxu0 %v539
        %801 = vmatpush.msra.mxu0 %v536
        %802 = vmatpush.msra.mxu0 %v533
        %803 = vmatpush.msra.mxu0 %v530
        %804 = vmatpush.msra.mxu0 %v527
        %805 = vmatpush.msra.mxu0 %v524
        %806 = vmatpush.msra.mxu0 %v521
        %807 = vmatpush.msra.mxu0 %v518
        %808 = vmatpush.msra.mxu0 %v515
        %809 = vmatmul.f32.gmra.mxu0 %v746
        %v810 = vpop.f32.mrf.mxu0
        %v811 = vadd.f32 %v567, %v810
        %812 = vdwg.mxu0
        %v813 = vadd.f32 %v750, %v771
        %v814 = vmul.f32 %v813, 0.5
        %v815 = vtanh.pop %v814
        %v816 = vadd.f32 %v815, 1.0
        %v817 = vmul.f32 %v816, 0.5
        %v818 = vadd.f32 %v751, %v791
        %v819 = vmul.f32 %v818, 0.5
        %v820 = vtanh.pop %v819
        %v821 = vadd.f32 %v820, 1.0
        %v822 = vmul.f32 %v821, 0.5
        %v823 = vmul.f32 %v817, %v811
        %v824 = vadd.f32 %v752, %v823
        %v825 = vtanh.pop %v824
        %vm826 = vcmp.gt.s32.totalorder %v300, 2
        %v827 = vsel %vm826, 1, 0
        %v828 = vcvt.s32.f32 %v827
        %v829 = vsub.f32 1.0, %v822
        %831 = vset.pattern.permute.xlu0 0
        %832 = vperm.xlu0 %831, %v828
        %v833 = vpop.permute.xlu0 %832
        %v835 = vmul.f32 %v833, %v829
        %v836 = vsub.f32 %v825, %v746
        %v837 = vmul.f32 %v835, %v836
        %v838 = vadd.f32 %v746, %v837
        %s839 = scalar_lea.vmem [#allocation2], 16
        %840 = vst [vmem:[%s839] sm:$0xff] %v838
        %s841 = scalar_lea.vmem [#allocation3], 72
        %v842 = vld [vmem:[%s841] sm:$0xff]
        %v843 = vld [vmem:[%s841 + $0x8] sm:$0xff]
        %v844 = vld [vmem:[%s841 + $0x10] sm:$0xff]
        %845 = vmatpush.msra.mxu0 %v558
        %846 = vmatpush.msra.mxu0 %v555
        %847 = vmatpush.msra.mxu0 %v552
        %848 = vmatpush.msra.mxu0 %v549
        %849 = vmatpush.msra.mxu0 %v546
        %850 = vmatpush.msra.mxu0 %v543
        %851 = vmatpush.msra.mxu0 %v540
        %852 = vmatpush.msra.mxu0 %v537
        %853 = vmatpush.msra.mxu0 %v534
        %854 = vmatpush.msra.mxu0 %v531
        %855 = vmatpush.msra.mxu0 %v528
        %856 = vmatpush.msra.mxu0 %v525
        %857 = vmatpush.msra.mxu0 %v522
        %858 = vmatpush.msra.mxu0 %v519
        %859 = vmatpush.msra.mxu0 %v516
        %860 = vmatpush.msra.mxu0 %v513
        %861 = vmatmul.f32.gmra.mxu0 %v838
        %v862 = vpop.f32.mrf.mxu0
        %v863 = vadd.f32 %v565, %v862
        %864 = vdwg.mxu0
        %865 = vmatpush.msra.mxu0 %v559
        %866 = vmatpush.msra.mxu0 %v556
        %867 = vmatpush.msra.mxu0 %v553
        %868 = vmatpush.msra.mxu0 %v550
        %869 = vmatpush.msra.mxu0 %v547
        %870 = vmatpush.msra.mxu0 %v544
        %871 = vmatpush.msra.mxu0 %v541
        %872 = vmatpush.msra.mxu0 %v538
        %873 = vmatpush.msra.mxu0 %v535
        %874 = vmatpush.msra.mxu0 %v532
        %875 = vmatpush.msra.mxu0 %v529
        %876 = vmatpush.msra.mxu0 %v526
        %877 = vmatpush.msra.mxu0 %v523
        %878 = vmatpush.msra.mxu0 %v520
        %879 = vmatpush.msra.mxu0 %v517
        %880 = vmatpush.msra.mxu0 %v514
        %881 = vmatmul.f32.gmra.mxu0 %v838
        %v882 = vpop.f32.mrf.mxu0
        %v883 = vadd.f32 %v566, %v882
        %884 = vdwg.mxu0
        %885 = vmatpush.msra.mxu0 %v560
        %886 = vmatpush.msra.mxu0 %v557
        %887 = vmatpush.msra.mxu0 %v554
        %888 = vmatpush.msra.mxu0 %v551
        %889 = vmatpush.msra.mxu0 %v548
        %890 = vmatpush.msra.mxu0 %v545
        %891 = vmatpush.msra.mxu0 %v542
        %892 = vmatpush.msra.mxu0 %v539
        %893 = vmatpush.msra.mxu0 %v536
        %894 = vmatpush.msra.mxu0 %v533
        %895 = vmatpush.msra.mxu0 %v530
        %896 = vmatpush.msra.mxu0 %v527
        %897 = vmatpush.msra.mxu0 %v524
        %898 = vmatpush.msra.mxu0 %v521
        %899 = vmatpush.msra.mxu0 %v518
        %900 = vmatpush.msra.mxu0 %v515
        %901 = vmatmul.f32.gmra.mxu0 %v838
        %v902 = vpop.f32.mrf.mxu0
        %v903 = vadd.f32 %v567, %v902
        %904 = vdwg.mxu0
        %v905 = vadd.f32 %v842, %v863
        %v906 = vmul.f32 %v905, 0.5
        %v907 = vtanh.pop %v906
        %v908 = vadd.f32 %v907, 1.0
        %v909 = vmul.f32 %v908, 0.5
        %v910 = vadd.f32 %v843, %v883
        %v911 = vmul.f32 %v910, 0.5
        %v912 = vtanh.pop %v911
        %v913 = vadd.f32 %v912, 1.0
        %v914 = vmul.f32 %v913, 0.5
        %v915 = vmul.f32 %v909, %v903
        %v916 = vadd.f32 %v844, %v915
        %v917 = vtanh.pop %v916
        %vm918 = vcmp.gt.s32.totalorder %v300, 3
        %v919 = vsel %vm918, 1, 0
        %v920 = vcvt.s32.f32 %v919
        %v921 = vsub.f32 1.0, %v914
        %923 = vset.pattern.permute.xlu0 0
        %924 = vperm.xlu0 %923, %v920
        %v925 = vpop.permute.xlu0 %924
        %v927 = vmul.f32 %v925, %v921
        %v928 = vsub.f32 %v917, %v838
        %v929 = vmul.f32 %v927, %v928
        %v930 = vadd.f32 %v838, %v929
        %s931 = scalar_lea.vmem [#allocation2], 24
        %932 = vst [vmem:[%s931] sm:$0xff] %v930
        %s933 = scalar_lea.vmem [#allocation3], 96
        %v934 = vld [vmem:[%s933] sm:$0xff]
        %v935 = vld [vmem:[%s933 + $0x8] sm:$0xff]
        %v936 = vld [vmem:[%s933 + $0x10] sm:$0xff]
        %937 = vmatpush.msra.mxu0 %v558
        %938 = vmatpush.msra.mxu0 %v555
        %939 = vmatpush.msra.mxu0 %v552
        %940 = vmatpush.msra.mxu0 %v549
        %941 = vmatpush.msra.mxu0 %v546
        %942 = vmatpush.msra.mxu0 %v543
        %943 = vmatpush.msra.mxu0 %v540
        %944 = vmatpush.msra.mxu0 %v537
        %945 = vmatpush.msra.mxu0 %v534
        %946 = vmatpush.msra.mxu0 %v531
        %947 = vmatpush.msra.mxu0 %v528
        %948 = vmatpush.msra.mxu0 %v525
        %949 = vmatpush.msra.mxu0 %v522
        %950 = vmatpush.msra.mxu0 %v519
        %951 = vmatpush.msra.mxu0 %v516
        %952 = vmatpush.msra.mxu0 %v513
        %953 = vmatmul.f32.gmra.mxu0 %v930
        %v954 = vpop.f32.mrf.mxu0
        %v955 = vadd.f32 %v565, %v954
        %956 = vdwg.mxu0
        %957 = vmatpush.msra.mxu0 %v559
        %958 = vmatpush.msra.mxu0 %v556
        %959 = vmatpush.msra.mxu0 %v553
        %960 = vmatpush.msra.mxu0 %v550
        %961 = vmatpush.msra.mxu0 %v547
        %962 = vmatpush.msra.mxu0 %v544
        %963 = vmatpush.msra.mxu0 %v541
        %964 = vmatpush.msra.mxu0 %v538
        %965 = vmatpush.msra.mxu0 %v535
        %966 = vmatpush.msra.mxu0 %v532
        %967 = vmatpush.msra.mxu0 %v529
        %968 = vmatpush.msra.mxu0 %v526
        %969 = vmatpush.msra.mxu0 %v523
        %970 = vmatpush.msra.mxu0 %v520
        %971 = vmatpush.msra.mxu0 %v517
        %972 = vmatpush.msra.mxu0 %v514
        %973 = vmatmul.f32.gmra.mxu0 %v930
        %v974 = vpop.f32.mrf.mxu0
        %v975 = vadd.f32 %v566, %v974
        %976 = vdwg.mxu0
        %977 = vmatpush.msra.mxu0 %v560
        %978 = vmatpush.msra.mxu0 %v557
        %979 = vmatpush.msra.mxu0 %v554
        %980 = vmatpush.msra.mxu0 %v551
        %981 = vmatpush.msra.mxu0 %v548
        %982 = vmatpush.msra.mxu0 %v545
        %983 = vmatpush.msra.mxu0 %v542
        %984 = vmatpush.msra.mxu0 %v539
        %985 = vmatpush.msra.mxu0 %v536
        %986 = vmatpush.msra.mxu0 %v533
        %987 = vmatpush.msra.mxu0 %v530
        %988 = vmatpush.msra.mxu0 %v527
        %989 = vmatpush.msra.mxu0 %v524
        %990 = vmatpush.msra.mxu0 %v521
        %991 = vmatpush.msra.mxu0 %v518
        %992 = vmatpush.msra.mxu0 %v515
        %993 = vmatmul.f32.gmra.mxu0 %v930
        %v994 = vpop.f32.mrf.mxu0
        %v995 = vadd.f32 %v567, %v994
        %996 = vdwg.mxu0
        %v997 = vadd.f32 %v934, %v955
        %v998 = vmul.f32 %v997, 0.5
        %v999 = vtanh.pop %v998
        %v1000 = vadd.f32 %v999, 1.0
        %v1001 = vmul.f32 %v1000, 0.5
        %v1002 = vadd.f32 %v935, %v975
        %v1003 = vmul.f32 %v1002, 0.5
        %v1004 = vtanh.pop %v1003
        %v1005 = vadd.f32 %v1004, 1.0
        %v1006 = vmul.f32 %v1005, 0.5
        %v1007 = vmul.f32 %v1001, %v995
        %v1008 = vadd.f32 %v936, %v1007
        %v1009 = vtanh.pop %v1008
        %vm1010 = vcmp.gt.s32.totalorder %v300, 4
        %v1011 = vsel %vm1010, 1, 0
        %v1012 = vcvt.s32.f32 %v1011
        %v1013 = vsub.f32 1.0, %v1006
        %1015 = vset.pattern.permute.xlu0 0
        %1016 = vperm.xlu0 %1015, %v1012
        %v1017 = vpop.permute.xlu0 %1016
        %v1019 = vmul.f32 %v1017, %v1013
        %v1020 = vsub.f32 %v1009, %v930
        %v1021 = vmul.f32 %v1019, %v1020
        %v1022 = vadd.f32 %v930, %v1021
        %s1023 = scalar_lea.vmem [#allocation2], 32
        %1024 = vst [vmem:[%s1023] sm:$0xff] %v1022
        %s1025 = scalar_lea.vmem [#allocation3], 120
        %v1026 = vld [vmem:[%s1025] sm:$0xff]
        %v1027 = vld [vmem:[%s1025 + $0x8] sm:$0xff]
        %v1028 = vld [vmem:[%s1025 + $0x10] sm:$0xff]
        %1029 = vmatpush.msra.mxu0 %v558
        %1030 = vmatpush.msra.mxu0 %v555
        %1031 = vmatpush.msra.mxu0 %v552
        %1032 = vmatpush.msra.mxu0 %v549
        %1033 = vmatpush.msra.mxu0 %v546
        %1034 = vmatpush.msra.mxu0 %v543
        %1035 = vmatpush.msra.mxu0 %v540
        %1036 = vmatpush.msra.mxu0 %v537
        %1037 = vmatpush.msra.mxu0 %v534
        %1038 = vmatpush.msra.mxu0 %v531
        %1039 = vmatpush.msra.mxu0 %v528
        %1040 = vmatpush.msra.mxu0 %v525
        %1041 = vmatpush.msra.mxu0 %v522
        %1042 = vmatpush.msra.mxu0 %v519
        %1043 = vmatpush.msra.mxu0 %v516
        %1044 = vmatpush.msra.mxu0 %v513
        %1045 = vmatmul.f32.gmra.mxu0 %v1022
        %v1046 = vpop.f32.mrf.mxu0
        %v1047 = vadd.f32 %v565, %v1046
        %1048 = vdwg.mxu0
        %1049 = vmatpush.msra.mxu0 %v559
        %1050 = vmatpush.msra.mxu0 %v556
        %1051 = vmatpush.msra.mxu0 %v553
        %1052 = vmatpush.msra.mxu0 %v550
        %1053 = vmatpush.msra.mxu0 %v547
        %1054 = vmatpush.msra.mxu0 %v544
        %1055 = vmatpush.msra.mxu0 %v541
        %1056 = vmatpush.msra.mxu0 %v538
        %1057 = vmatpush.msra.mxu0 %v535
        %1058 = vmatpush.msra.mxu0 %v532
        %1059 = vmatpush.msra.mxu0 %v529
        %1060 = vmatpush.msra.mxu0 %v526
        %1061 = vmatpush.msra.mxu0 %v523
        %1062 = vmatpush.msra.mxu0 %v520
        %1063 = vmatpush.msra.mxu0 %v517
        %1064 = vmatpush.msra.mxu0 %v514
        %1065 = vmatmul.f32.gmra.mxu0 %v1022
        %v1066 = vpop.f32.mrf.mxu0
        %v1067 = vadd.f32 %v566, %v1066
        %1068 = vdwg.mxu0
        %1069 = vmatpush.msra.mxu0 %v560
        %1070 = vmatpush.msra.mxu0 %v557
        %1071 = vmatpush.msra.mxu0 %v554
        %1072 = vmatpush.msra.mxu0 %v551
        %1073 = vmatpush.msra.mxu0 %v548
        %1074 = vmatpush.msra.mxu0 %v545
        %1075 = vmatpush.msra.mxu0 %v542
        %1076 = vmatpush.msra.mxu0 %v539
        %1077 = vmatpush.msra.mxu0 %v536
        %1078 = vmatpush.msra.mxu0 %v533
        %1079 = vmatpush.msra.mxu0 %v530
        %1080 = vmatpush.msra.mxu0 %v527
        %1081 = vmatpush.msra.mxu0 %v524
        %1082 = vmatpush.msra.mxu0 %v521
        %1083 = vmatpush.msra.mxu0 %v518
        %1084 = vmatpush.msra.mxu0 %v515
        %1085 = vmatmul.f32.gmra.mxu0 %v1022
        %v1086 = vpop.f32.mrf.mxu0
        %v1087 = vadd.f32 %v567, %v1086
        %1088 = vdwg.mxu0
        %v1089 = vadd.f32 %v1026, %v1047
        %v1090 = vmul.f32 %v1089, 0.5
        %v1091 = vtanh.pop %v1090
        %v1092 = vadd.f32 %v1091, 1.0
        %v1093 = vmul.f32 %v1092, 0.5
        %v1094 = vadd.f32 %v1027, %v1067
        %v1095 = vmul.f32 %v1094, 0.5
        %v1096 = vtanh.pop %v1095
        %v1097 = vadd.f32 %v1096, 1.0
        %v1098 = vmul.f32 %v1097, 0.5
        %v1099 = vmul.f32 %v1093, %v1087
        %v1100 = vadd.f32 %v1028, %v1099
        %v1101 = vtanh.pop %v1100
        %vm1102 = vcmp.gt.s32.totalorder %v300, 5
        %v1103 = vsel %vm1102, 1, 0
        %v1104 = vcvt.s32.f32 %v1103
        %v1105 = vsub.f32 1.0, %v1098
        %1107 = vset.pattern.permute.xlu0 0
        %1108 = vperm.xlu0 %1107, %v1104
        %v1109 = vpop.permute.xlu0 %1108
        %v1111 = vmul.f32 %v1109, %v1105
        %v1112 = vsub.f32 %v1101, %v1022
        %v1113 = vmul.f32 %v1111, %v1112
        %v1114 = vadd.f32 %v1022, %v1113
        %s1115 = scalar_lea.vmem [#allocation2], 40
        %1116 = vst [vmem:[%s1115] sm:$0xff] %v1114
        %s1117 = scalar_lea.vmem [#allocation3], 144
        %v1118 = vld [vmem:[%s1117] sm:$0xff]
        %v1119 = vld [vmem:[%s1117 + $0x8] sm:$0xff]
        %v1120 = vld [vmem:[%s1117 + $0x10] sm:$0xff]
        %1121 = vmatpush.msra.mxu0 %v558
        %1122 = vmatpush.msra.mxu0 %v555
        %1123 = vmatpush.msra.mxu0 %v552
        %1124 = vmatpush.msra.mxu0 %v549
        %1125 = vmatpush.msra.mxu0 %v546
        %1126 = vmatpush.msra.mxu0 %v543
        %1127 = vmatpush.msra.mxu0 %v540
        %1128 = vmatpush.msra.mxu0 %v537
        %1129 = vmatpush.msra.mxu0 %v534
        %1130 = vmatpush.msra.mxu0 %v531
        %1131 = vmatpush.msra.mxu0 %v528
        %1132 = vmatpush.msra.mxu0 %v525
        %1133 = vmatpush.msra.mxu0 %v522
        %1134 = vmatpush.msra.mxu0 %v519
        %1135 = vmatpush.msra.mxu0 %v516
        %1136 = vmatpush.msra.mxu0 %v513
        %1137 = vmatmul.f32.gmra.mxu0 %v1114
        %v1138 = vpop.f32.mrf.mxu0
        %v1139 = vadd.f32 %v565, %v1138
        %1140 = vdwg.mxu0
        %1141 = vmatpush.msra.mxu0 %v559
        %1142 = vmatpush.msra.mxu0 %v556
        %1143 = vmatpush.msra.mxu0 %v553
        %1144 = vmatpush.msra.mxu0 %v550
        %1145 = vmatpush.msra.mxu0 %v547
        %1146 = vmatpush.msra.mxu0 %v544
        %1147 = vmatpush.msra.mxu0 %v541
        %1148 = vmatpush.msra.mxu0 %v538
        %1149 = vmatpush.msra.mxu0 %v535
        %1150 = vmatpush.msra.mxu0 %v532
        %1151 = vmatpush.msra.mxu0 %v529
        %1152 = vmatpush.msra.mxu0 %v526
        %1153 = vmatpush.msra.mxu0 %v523
        %1154 = vmatpush.msra.mxu0 %v520
        %1155 = vmatpush.msra.mxu0 %v517
        %1156 = vmatpush.msra.mxu0 %v514
        %1157 = vmatmul.f32.gmra.mxu0 %v1114
        %v1158 = vpop.f32.mrf.mxu0
        %v1159 = vadd.f32 %v566, %v1158
        %1160 = vdwg.mxu0
        %1161 = vmatpush.msra.mxu0 %v560
        %1162 = vmatpush.msra.mxu0 %v557
        %1163 = vmatpush.msra.mxu0 %v554
        %1164 = vmatpush.msra.mxu0 %v551
        %1165 = vmatpush.msra.mxu0 %v548
        %1166 = vmatpush.msra.mxu0 %v545
        %1167 = vmatpush.msra.mxu0 %v542
        %1168 = vmatpush.msra.mxu0 %v539
        %1169 = vmatpush.msra.mxu0 %v536
        %1170 = vmatpush.msra.mxu0 %v533
        %1171 = vmatpush.msra.mxu0 %v530
        %1172 = vmatpush.msra.mxu0 %v527
        %1173 = vmatpush.msra.mxu0 %v524
        %1174 = vmatpush.msra.mxu0 %v521
        %1175 = vmatpush.msra.mxu0 %v518
        %1176 = vmatpush.msra.mxu0 %v515
        %1177 = vmatmul.f32.gmra.mxu0 %v1114
        %v1178 = vpop.f32.mrf.mxu0
        %v1179 = vadd.f32 %v567, %v1178
        %1180 = vdwg.mxu0
        %v1181 = vadd.f32 %v1118, %v1139
        %v1182 = vmul.f32 %v1181, 0.5
        %v1183 = vtanh.pop %v1182
        %v1184 = vadd.f32 %v1183, 1.0
        %v1185 = vmul.f32 %v1184, 0.5
        %v1186 = vadd.f32 %v1119, %v1159
        %v1187 = vmul.f32 %v1186, 0.5
        %v1188 = vtanh.pop %v1187
        %v1189 = vadd.f32 %v1188, 1.0
        %v1190 = vmul.f32 %v1189, 0.5
        %v1191 = vmul.f32 %v1185, %v1179
        %v1192 = vadd.f32 %v1120, %v1191
        %v1193 = vtanh.pop %v1192
        %vm1194 = vcmp.gt.s32.totalorder %v300, 6
        %v1195 = vsel %vm1194, 1, 0
        %v1196 = vcvt.s32.f32 %v1195
        %v1197 = vsub.f32 1.0, %v1190
        %1199 = vset.pattern.permute.xlu0 0
        %1200 = vperm.xlu0 %1199, %v1196
        %v1201 = vpop.permute.xlu0 %1200
        %v1203 = vmul.f32 %v1201, %v1197
        %v1204 = vsub.f32 %v1193, %v1114
        %v1205 = vmul.f32 %v1203, %v1204
        %v1206 = vadd.f32 %v1114, %v1205
        %s1207 = scalar_lea.vmem [#allocation2], 48
        %1208 = vst [vmem:[%s1207] sm:$0xff] %v1206
        %s1209 = scalar_lea.vmem [#allocation3], 168
        %v1210 = vld [vmem:[%s1209] sm:$0xff]
        %v1211 = vld [vmem:[%s1209 + $0x8] sm:$0xff]
        %v1212 = vld [vmem:[%s1209 + $0x10] sm:$0xff]
        %1213 = vmatpush.msra.mxu0 %v558
        %1214 = vmatpush.msra.mxu0 %v555
        %1215 = vmatpush.msra.mxu0 %v552
        %1216 = vmatpush.msra.mxu0 %v549
        %1217 = vmatpush.msra.mxu0 %v546
        %1218 = vmatpush.msra.mxu0 %v543
        %1219 = vmatpush.msra.mxu0 %v540
        %1220 = vmatpush.msra.mxu0 %v537
        %1221 = vmatpush.msra.mxu0 %v534
        %1222 = vmatpush.msra.mxu0 %v531
        %1223 = vmatpush.msra.mxu0 %v528
        %1224 = vmatpush.msra.mxu0 %v525
        %1225 = vmatpush.msra.mxu0 %v522
        %1226 = vmatpush.msra.mxu0 %v519
        %1227 = vmatpush.msra.mxu0 %v516
        %1228 = vmatpush.msra.mxu0 %v513
        %1229 = vmatmul.f32.gmra.mxu0 %v1206
        %v1230 = vpop.f32.mrf.mxu0
        %v1231 = vadd.f32 %v565, %v1230
        %1232 = vdwg.mxu0
        %1233 = vmatpush.msra.mxu0 %v559
        %1234 = vmatpush.msra.mxu0 %v556
        %1235 = vmatpush.msra.mxu0 %v553
        %1236 = vmatpush.msra.mxu0 %v550
        %1237 = vmatpush.msra.mxu0 %v547
        %1238 = vmatpush.msra.mxu0 %v544
        %1239 = vmatpush.msra.mxu0 %v541
        %1240 = vmatpush.msra.mxu0 %v538
        %1241 = vmatpush.msra.mxu0 %v535
        %1242 = vmatpush.msra.mxu0 %v532
        %1243 = vmatpush.msra.mxu0 %v529
        %1244 = vmatpush.msra.mxu0 %v526
        %1245 = vmatpush.msra.mxu0 %v523
        %1246 = vmatpush.msra.mxu0 %v520
        %1247 = vmatpush.msra.mxu0 %v517
        %1248 = vmatpush.msra.mxu0 %v514
        %1249 = vmatmul.f32.gmra.mxu0 %v1206
        %v1250 = vpop.f32.mrf.mxu0
        %v1251 = vadd.f32 %v566, %v1250
        %1252 = vdwg.mxu0
        %1253 = vmatpush.msra.mxu0 %v560
        %1254 = vmatpush.msra.mxu0 %v557
        %1255 = vmatpush.msra.mxu0 %v554
        %1256 = vmatpush.msra.mxu0 %v551
        %1257 = vmatpush.msra.mxu0 %v548
        %1258 = vmatpush.msra.mxu0 %v545
        %1259 = vmatpush.msra.mxu0 %v542
        %1260 = vmatpush.msra.mxu0 %v539
        %1261 = vmatpush.msra.mxu0 %v536
        %1262 = vmatpush.msra.mxu0 %v533
        %1263 = vmatpush.msra.mxu0 %v530
        %1264 = vmatpush.msra.mxu0 %v527
        %1265 = vmatpush.msra.mxu0 %v524
        %1266 = vmatpush.msra.mxu0 %v521
        %1267 = vmatpush.msra.mxu0 %v518
        %1268 = vmatpush.msra.mxu0 %v515
        %1269 = vmatmul.f32.gmra.mxu0 %v1206
        %v1270 = vpop.f32.mrf.mxu0
        %v1271 = vadd.f32 %v567, %v1270
        %1272 = vdwg.mxu0
        %v1273 = vadd.f32 %v1210, %v1231
        %v1274 = vmul.f32 %v1273, 0.5
        %v1275 = vtanh.pop %v1274
        %v1276 = vadd.f32 %v1275, 1.0
        %v1277 = vmul.f32 %v1276, 0.5
        %v1278 = vadd.f32 %v1211, %v1251
        %v1279 = vmul.f32 %v1278, 0.5
        %v1280 = vtanh.pop %v1279
        %v1281 = vadd.f32 %v1280, 1.0
        %v1282 = vmul.f32 %v1281, 0.5
        %v1283 = vmul.f32 %v1277, %v1271
        %v1284 = vadd.f32 %v1212, %v1283
        %v1285 = vtanh.pop %v1284
        %vm1286 = vcmp.gt.s32.totalorder %v300, 7
        %v1287 = vsel %vm1286, 1, 0
        %v1288 = vcvt.s32.f32 %v1287
        %v1289 = vsub.f32 1.0, %v1282
        %1291 = vset.pattern.permute.xlu0 0
        %1292 = vperm.xlu0 %1291, %v1288
        %v1293 = vpop.permute.xlu0 %1292
        %v1295 = vmul.f32 %v1293, %v1289
        %v1296 = vsub.f32 %v1285, %v1206
        %v1297 = vmul.f32 %v1295, %v1296
        %v1298 = vadd.f32 %v1206, %v1297
        %s1299 = scalar_lea.vmem [#allocation2], 56
        %1300 = vst [vmem:[%s1299] sm:$0xff] %v1298
        %1301 = vst [vmem:[%s270] sm:$0xff] %v1298
        %p1302 = scmp.eq.s32.totalorder %s25, 1
        // Predicated region
        $region49: #{tpu_custom_call.1} parent=35 // pred_check
          %p1303 = pneg %p1302
        $region50: #{tpu_custom_call.1} parent=35 // pred_check_branch
          %1305 = sbr.rel (%p1303) target = $region52
        $region51: #{tpu_custom_call.1} parent=35 // pred_region
          %v1306 = vld [vmem:[#allocation2] sm:$0xff]
          %v1307 = vld [vmem:[#allocation2 + $0x8] sm:$0xff]
          %v1308 = vld [vmem:[#allocation2 + $0x10] sm:$0xff]
          %v1309 = vld [vmem:[#allocation2 + $0x18] sm:$0xff]
          %v1310 = vld [vmem:[#allocation2 + $0x20] sm:$0xff]
          %v1311 = vld [vmem:[#allocation2 + $0x28] sm:$0xff]
          %v1312 = vld [vmem:[#allocation2 + $0x30] sm:$0xff]
          %v1313 = vld [vmem:[#allocation2 + $0x38] sm:$0xff]
          %1314 = vset.pattern.permute.xlu0 0
          %1315 = vperm.xlu0 %1314, %v300
          %v1316 = vpop.permute.xlu0 %1315
          %vm1317 = vcmp.gt.s32.totalorder %v1316, 0
          %vm1318 = vcmp.gt.s32.totalorder %v1316, 1
          %vm1319 = vcmp.gt.s32.totalorder %v1316, 2
          %vm1320 = vcmp.gt.s32.totalorder %v1316, 3
          %vm1321 = vcmp.gt.s32.totalorder %v1316, 4
          %vm1322 = vcmp.gt.s32.totalorder %v1316, 5
          %vm1323 = vcmp.gt.s32.totalorder %v1316, 6
          %vm1324 = vcmp.gt.s32.totalorder %v1316, 7
          %v1325 = vsel %vm1317, %v1306, 0.0
          %v1326 = vsel %vm1318, %v1307, 0.0
          %v1327 = vsel %vm1319, %v1308, 0.0
          %v1328 = vsel %vm1320, %v1309, 0.0
          %v1329 = vsel %vm1321, %v1310, 0.0
          %v1330 = vsel %vm1322, %v1311, 0.0
          %v1331 = vsel %vm1323, %v1312, 0.0
          %v1332 = vsel %vm1324, %v1313, 0.0
          %1333 = vst [vmem:[#allocation8] sm:$0xff] %v1325
          %1334 = vst [vmem:[#allocation8 + $0x8] sm:$0xff] %v1326
          %1335 = vst [vmem:[#allocation8 + $0x10] sm:$0xff] %v1327
          %1336 = vst [vmem:[#allocation8 + $0x18] sm:$0xff] %v1328
          %1337 = vst [vmem:[#allocation8 + $0x20] sm:$0xff] %v1329
          %1338 = vst [vmem:[#allocation8 + $0x28] sm:$0xff] %v1330
          %1339 = vst [vmem:[#allocation8 + $0x30] sm:$0xff] %v1331
          %1340 = vst [vmem:[#allocation8 + $0x38] sm:$0xff] %v1332
        $region52: #{tpu_custom_call.1} parent=35 // pred_fallthru
          _
        %s1341 = sand.u32 %s153, 1
        %s1342 = scalar_lea.sflag [#allocation10], %s1341
        %s1343 = sand.u32 %s153, 1
        %s1344 = smul.addr %s1343, 8
        %s1345 = scalar_lea.vmem [#allocation9], %s1344
        // Predicated region
        $region53: #{tpu_custom_call.1} parent=35 // pred_check
          %p1346 = pneg %p137
        $region54: #{tpu_custom_call.1} parent=35 // pred_check_branch
          %1348 = sbr.rel (%p1346) target = $region56
        $region55: #{tpu_custom_call.1} parent=35 // pred_region
          %1350 = vsyncadd [#allocation7], 0
          %s1351 = sshll.u32 [#allocation8], 4
          %s1352 = int_to_ptr.vmem [resolvable:$true] %s1351
          %s1353 = sshll.u32 %s5, 4
          %s1354 = int_to_ptr.hbm [resolvable:$true] %s1353
          %1359 = dma.vmem_to_hbm [thread:$0]  %s1352, 1024, %s1354, [#allocation7], 128, 128, 8
        $region56: #{tpu_custom_call.1} parent=35 // pred_fallthru
          _
        // Predicated region
        $region57: #{tpu_custom_call.1} parent=35 // pred_check
          %p1360 = pneg %p163
        $region58: #{tpu_custom_call.1} parent=35 // pred_check_branch
          %1362 = sbr.rel (%p1360) target = $region60
        $region59: #{tpu_custom_call.1} parent=35 // pred_region
          %1364 = vsyncadd %s1342, 0
          %s1365 = smul.addr %s25, 8
          %s1366 = scalar_lea.hbm %s6, %s1365
          %s1368 = sshll.u32 %s1345, 4
          %s1369 = int_to_ptr.vmem [resolvable:$true] %s1368
          %s1370 = sshll.u32 %s1366, 4
          %s1371 = int_to_ptr.hbm [resolvable:$true] %s1370
          %1373 = dma.vmem_to_hbm [thread:$0]  %s1369, 128, %s1371, %s1342
        $region60: #{tpu_custom_call.1} parent=35 // pred_fallthru
          _
        // Predicated region
        $region61: #{tpu_custom_call.1} parent=35 // pred_check
          %p1374 = pneg %p137
        $region62: #{tpu_custom_call.1} parent=35 // pred_check_branch
          %1376 = sbr.rel (%p1374) target = $region64
        $region63: #{tpu_custom_call.1} parent=35 // pred_region
          %1378 = dma.done [#allocation7], 1024
        $region64: #{tpu_custom_call.1} parent=35 // pred_fallthru
          _
      $region36: #{tpu_custom_call.1} parent=5 // pred_fallthru
        _
      %p1379 = scmp.le.s32.totalorder 2, %s20
      // Predicated region
      $region65: #{tpu_custom_call.1} parent=5 // pred_check
        %p1380 = pneg %p1379
      $region66: #{tpu_custom_call.1} parent=5 // pred_check_branch
        %1382 = sbr.rel (%p1380) target = $region68
      $region67: #{tpu_custom_call.1} parent=5 // pred_region
        %s1383 = ssub.s32 %s20, 2
        // Predicated region
        $region69: #{tpu_custom_call.1} parent=67 // pred_check
          %p1384 = pneg %p169
        $region70: #{tpu_custom_call.1} parent=67 // pred_check_branch
          %1386 = sbr.rel (%p1384) target = $region72
        $region71: #{tpu_custom_call.1} parent=67 // pred_region
          %s1387 = sand.u32 %s154, 1
          %s1388 = scalar_lea.sflag [#allocation10], %s1387
          %s1389 = sand.u32 %s154, 1
          %s1390 = smul.addr %s1389, 8
          %s1391 = scalar_lea.vmem [#allocation9], %s1390
          %1393 = dma.done %s1388, 128
        $region72: #{tpu_custom_call.1} parent=67 // pred_fallthru
          _
      $region68: #{tpu_custom_call.1} parent=5 // pred_fallthru
        _
    $region6: #{tpu_custom_call.1} parent=1 // loop_footer
      %s24 = sadd.s32 1, %s20
    $region7: #{tpu_custom_call.1} parent=1 // loop_footer_branch
      %19 = sbr.rel target = $region3
    $region8: #{tpu_custom_call.1} parent=1 // loop_exit
      _
    %1394 = vsyncpa [#allocation6], 1
    %s1395 = scalar_lea.sflag [#allocation6], 1
    %1396 = vsyncpa %s1395, 1
    %1397 = vsyncpa [#allocation7], 1
    %s1398 = scalar_lea.sflag [#allocation7], 1
    %1399 = vsyncpa %s1398, 1
    %1400 = vsyncpa [#allocation10], 1
    %s1401 = scalar_lea.sflag [#allocation10], 1
    %1402 = vsyncpa %s1401, 1
  %1403 = vsyncmov [#allocation4]
  %s1404 = vpop.sfrf %1403
  %p1405 = scmp.eq.s32.totalorder %s1404, 0
  %p1406 = pneg %p1405
  %1408 = shalt.err (%p1406)

</llo_original>
